<compile_context>
chip_gen: v7x
topology: tpu7x:2x2x1
jax: 0.10.0
libtpu: 0.0.40
codegen_flags: <defaults>
</compile_context>

<pallas_src>
import functools

import jax
import jax.numpy as jnp
from jax.experimental import pallas as pl
from jax.experimental.pallas import tpu as pltpu


def _ru(x, m):
    """Round x up to a multiple of m."""
    return ((x + m - 1) // m) * m


def _vmem_capacity_bytes():
    """Per-core VMEM capacity; conservative (v7x-sized) fallback on failure."""
    try:
        return int(pltpu.get_tpu_info().vmem_capacity_bytes)
    except Exception:
        return 64 * 2**20


def _conv_kernel(x_ref, w_ref, o_ref, *, KH, KW, stride, toh, OW_t, Cin):
    """One (batch, cout-tile, output-row-tile) grid step.

    x_ref: (Hp_t, Wp_t, Cin)   -- padded NHWC image, resident per batch
                                  element (index_map depends only on n).
    w_ref: (KH*KW*Cin, tco)    -- weights with all taps folded into the
                                  contraction axis; resident per cout tile.
    o_ref: (toh, OW_t, tco)    -- one output row tile.
    """
    t = pl.program_id(2)
    row0 = pl.multiple_of(t * (toh * stride), toh * stride)
    tco = o_ref.shape[-1]
    K = KH * KW * Cin

    # In-VMEM "im2col": concatenate the KH*KW shifted windows along the
    # channel axis so the whole reduction is ONE MXU matmul with
    # K = KH*KW*Cin (no per-tap accumulator read-modify-write passes).
    pieces = []
    for kh in range(KH):
        for kw in range(KW):
            if stride == 1:
                pieces.append(
                    x_ref[pl.ds(row0 + kh, toh), pl.ds(kw, OW_t), :]
                )
            else:
                pieces.append(
                    x_ref[
                        pl.ds(row0 + kh, toh, stride=stride),
                        pl.ds(kw, OW_t, stride=stride),
                        :,
                    ]
                )
    lhs = pieces[0] if len(pieces) == 1 else jnp.concatenate(pieces, axis=-1)
    # OW_t is a multiple of 8, so collapsing (toh, OW_t) does not cross a
    # sublane-tile boundary (no relayout copy).
    lhs = lhs.reshape(toh * OW_t, K)

    # TODO(synk): once MXU-bound (large Cin), cast lhs/w to bf16 with f32
    # accumulation (bf16x3 if 1e-4 tolerance must hold) for v6e/v7x MXU rate.
    out = jnp.dot(lhs, w_ref[...], preferred_element_type=jnp.float32)
    o_ref[...] = out.reshape(toh, OW_t, tco).astype(o_ref.dtype)


@functools.partial(jax.jit, static_argnames=("stride", "padding"))
def conv2d_pallas(x, weight, *, stride=1, padding=0):
    """Equivalent of nn.Conv2d(..., bias=False).forward.

    x:      [N, Cin, H, W]   (NCHW, like PyTorch)
    weight: [Cout, Cin, KH, KW]
    returns [N, Cout, OH, OW]
    """
    N, Cin, H, W = x.shape
    Cout, Cin_w, KH, KW = weight.shape
    assert Cin == Cin_w

    OH = (H + 2 * padding - KH) // stride + 1
    OW = (W + 2 * padding - KW) // stride + 1
    K = KH * KW * Cin

    cap = _vmem_capacity_bytes()
    budget = int(0.55 * cap)  # leave headroom for pipelining / compiler scratch

    # ---- Cout tiling -----------------------------------------------------
    # Small Cout: store the true channel count (masked lanes) -> 1x HBM
    # writeback.  Large Cout: lane-dense 128-multiple tiles.
    if Cout <= 128:
        Cout_pad = tco = Cout
    else:
        Cout_pad = _ru(Cout, 128)
        tco = 128
        w_budget = budget // 4
        for cand in range(Cout_pad, 127, -128):
            if Cout_pad % cand == 0 and 2 * _ru(K, 8) * cand * 4 <= w_budget:
                tco = cand
                break
        # TODO(synk): if even tco=128 exceeds the weight budget (huge
        # Cin*KH*KW), split K across a reduction grid axis.

    # ---- Output-row tiling (no "toh divides OH" requirement) --------------
    OW_t = _ru(OW, 8)  # keeps the (toh, OW_t) collapse/split relayout-free

    def vmem_estimate(toh):
        OH_t = _ru(OH, toh)
        Hp_t = max(H + 2 * padding, (OH_t - 1) * stride + KH)
        Wp_t = max(W + 2 * padding, (OW_t - 1) * stride + KW)
        img = Hp_t * _ru(Wp_t, 8) * _ru(Cin, 128) * 4     # lane-padded image
        wt = _ru(K, 8) * _ru(tco, 128) * 4
        outb = toh * OW_t * _ru(tco, 128) * 4
        lhs = toh * OW_t * _ru(K, 128) * 4
        # 2x buffers for pipelined blocks + folded-LHS temp + f32 acc.
        return 2 * img + 2 * wt + 2 * outb + lhs + outb

    toh = 1
    for cand in range(min(OH, 512), 0, -1):
        if vmem_estimate(cand) <= budget:
            toh = cand
            break
    # TODO(synk): if even toh=1 overflows the budget (very large images with
    # tiny Cin on lanes), switch to row-tiled input blocks with a manual halo
    # DMA instead of keeping the whole padded image resident.

    OH_t = _ru(OH, toh)
    Hp_t = max(H + 2 * padding, (OH_t - 1) * stride + KH)
    Wp_t = max(W + 2 * padding, (OW_t - 1) * stride + KW)

    # ---- Host-side layout prep (one pass each, no HBM im2col) -------------
    x_nhwc = jnp.transpose(x, (0, 2, 3, 1))
    x_nhwc = jnp.pad(
        x_nhwc,
        (
            (0, 0),
            (padding, Hp_t - H - padding),
            (padding, Wp_t - W - padding),
            (0, 0),
        ),
    )

    # Weights OIHW -> (kh, kw, cin)-folded contraction axis x Cout.
    w = jnp.transpose(weight, (2, 3, 1, 0)).reshape(K, Cout)
    if Cout_pad != Cout:
        w = jnp.pad(w, ((0, 0), (0, Cout_pad - Cout)))

    # TODO(synk): for stride > 1, a host-side space-to-depth pre-pass (fold
    # stride^2 into channels) would turn this into a stride-1 conv and avoid
    # strided sublane loads inside the kernel.

    kernel = functools.partial(
        _conv_kernel, KH=KH, KW=KW, stride=stride, toh=toh, OW_t=OW_t, Cin=Cin
    )

    est = vmem_estimate(toh)
    vmem_limit = int(min(0.9 * cap, max(32 * 2**20, 2 * est)))

    flops = 2 * N * OH * OW * Cout * Cin * KH * KW
    bytes_accessed = 4 * (x_nhwc.size + w.size + N * OH_t * OW_t * Cout_pad)

    out = pl.pallas_call(
        kernel,
        out_shape=jax.ShapeDtypeStruct((N, OH_t, OW_t, Cout_pad), x.dtype),
        grid_spec=pltpu.PrefetchScalarGridSpec(
            num_scalar_prefetch=0,
            grid=(N, Cout_pad // tco, OH_t // toh),
            in_specs=[
                # Whole padded image per batch element; not re-DMA'd across
                # the cout / row-tile grid axes (index depends only on n).
                pl.BlockSpec(
                    (None, Hp_t, Wp_t, Cin), lambda n, co, t: (n, 0, 0, 0)
                ),
                # One folded-K weight tile; constant across row tiles.
                pl.BlockSpec((K, tco), lambda n, co, t: (0, co)),
            ],
            out_specs=pl.BlockSpec(
                (None, toh, OW_t, tco), lambda n, co, t: (n, t, 0, co)
            ),
        ),
        compiler_params=pltpu.CompilerParams(
            dimension_semantics=("parallel", "parallel", "parallel"),
            vmem_limit_bytes=vmem_limit,
        ),
        cost_estimate=pl.CostEstimate(
            flops=flops, transcendentals=0, bytes_accessed=bytes_accessed
        ),
    )(x_nhwc, w)

    # Drop OH/OW/Cout padding and convert back to PyTorch's NCHW layout.
    return jnp.transpose(out[:, :OH, :OW, :Cout], (0, 3, 1, 2))


if __name__ == "__main__":
    # Small shapes consistent with the module: batch=2, Cin=4, Cout=8,
    # spatial 16x16, kernel 3x3, stride=1, padding=1.
    key = jax.random.PRNGKey(0)
    kx, kw_ = jax.random.split(key)

    N, Cin, H, W = 2, 4, 16, 16
    Cout, KH, KW = 8, 3, 3
    stride, padding = 1, 1

    x = jax.random.normal(kx, (N, Cin, H, W), dtype=jnp.float32)
    weight = jax.random.normal(kw_, (Cout, Cin, KH, KW), dtype=jnp.float32) * 0.1

    out = conv2d_pallas(x, weight, stride=stride, padding=padding)
    out = jax.block_until_ready(out)

    # Sanity check against XLA's native convolution (same NCHW semantics).
    ref = jax.lax.conv_general_dilated(
        x, weight,
        window_strides=(stride, stride),
        padding=[(padding, padding), (padding, padding)],
        dimension_numbers=("NCHW", "OIHW", "NCHW"),
    )
    assert out.shape == ref.shape
    assert jnp.allclose(out, ref, atol=1e-4, rtol=1e-4)

    print("KERNEL_OK")
</pallas_src>

<mosaic_0001>
module attributes {stable_mosaic.version = 11 : i64} {
  func.func @_conv_kernel(%arg0: i32, %arg1: i32, %arg2: i32, %arg3: memref<1x18x18x4xf32, #tpu.memory_space<vmem>>, %arg4: memref<36x8xf32, #tpu.memory_space<vmem>>, %arg5: memref<1x16x16x8xf32, #tpu.memory_space<vmem>>) attributes {dimension_semantics = [#tpu.dimension_semantics<parallel>, #tpu.dimension_semantics<parallel>, #tpu.dimension_semantics<parallel>], iteration_bounds = array<i64: 2, 1, 1>, scalar_prefetch = 0 : i64, scratch_operands = 0 : i64, tpu.core_type = #tpu.core_type<tc>, window_params = [{transform_indices = @transform_0, window_bounds = array<i64: 1, 18, 18, 4>}, {transform_indices = @transform_1, window_bounds = array<i64: 36, 8>}, {transform_indices = @transform_2, window_bounds = array<i64: 1, 16, 16, 8>}]} {
    %c16_i32 = arith.constant 16 : i32
    %0 = arith.muli %arg2, %c16_i32 : i32
    %1 = tpu.assume_multiple %0, 16 : i32
    %c0_i32 = arith.constant 0 : i32
    %2 = arith.addi %1, %c0_i32 : i32
    %c0 = arith.constant 0 : index
    %3 = arith.index_cast %2 : i32 to index
    %c0_0 = arith.constant 0 : index
    %c0_1 = arith.constant 0 : index
    %4 = vector.load %arg3[%c0, %3, %c0_0, %c0_1] : memref<1x18x18x4xf32, #tpu.memory_space<vmem>>, vector<1x16x16x4xf32>
    %5 = vector.shape_cast %4 : vector<1x16x16x4xf32> to vector<16x16x4xf32>
    %c0_i32_2 = arith.constant 0 : i32
    %6 = arith.addi %1, %c0_i32_2 : i32
    %c0_3 = arith.constant 0 : index
    %7 = arith.index_cast %6 : i32 to index
    %c1 = arith.constant 1 : index
    %c0_4 = arith.constant 0 : index
    %8 = vector.load %arg3[%c0_3, %7, %c1, %c0_4] : memref<1x18x18x4xf32, #tpu.memory_space<vmem>>, vector<1x16x16x4xf32>
    %9 = vector.shape_cast %8 : vector<1x16x16x4xf32> to vector<16x16x4xf32>
    %c0_i32_5 = arith.constant 0 : i32
    %10 = arith.addi %1, %c0_i32_5 : i32
    %c0_6 = arith.constant 0 : index
    %11 = arith.index_cast %10 : i32 to index
    %c2 = arith.constant 2 : index
    %c0_7 = arith.constant 0 : index
    %12 = vector.load %arg3[%c0_6, %11, %c2, %c0_7] : memref<1x18x18x4xf32, #tpu.memory_space<vmem>>, vector<1x16x16x4xf32>
    %13 = vector.shape_cast %12 : vector<1x16x16x4xf32> to vector<16x16x4xf32>
    %c1_i32 = arith.constant 1 : i32
    %14 = arith.addi %1, %c1_i32 : i32
    %c0_8 = arith.constant 0 : index
    %15 = arith.index_cast %14 : i32 to index
    %c0_9 = arith.constant 0 : index
    %c0_10 = arith.constant 0 : index
    %16 = vector.load %arg3[%c0_8, %15, %c0_9, %c0_10] : memref<1x18x18x4xf32, #tpu.memory_space<vmem>>, vector<1x16x16x4xf32>
    %17 = vector.shape_cast %16 : vector<1x16x16x4xf32> to vector<16x16x4xf32>
    %c1_i32_11 = arith.constant 1 : i32
    %18 = arith.addi %1, %c1_i32_11 : i32
    %c0_12 = arith.constant 0 : index
    %19 = arith.index_cast %18 : i32 to index
    %c1_13 = arith.constant 1 : index
    %c0_14 = arith.constant 0 : index
    %20 = vector.load %arg3[%c0_12, %19, %c1_13, %c0_14] : memref<1x18x18x4xf32, #tpu.memory_space<vmem>>, vector<1x16x16x4xf32>
    %21 = vector.shape_cast %20 : vector<1x16x16x4xf32> to vector<16x16x4xf32>
    %c1_i32_15 = arith.constant 1 : i32
    %22 = arith.addi %1, %c1_i32_15 : i32
    %c0_16 = arith.constant 0 : index
    %23 = arith.index_cast %22 : i32 to index
    %c2_17 = arith.constant 2 : index
    %c0_18 = arith.constant 0 : index
    %24 = vector.load %arg3[%c0_16, %23, %c2_17, %c0_18] : memref<1x18x18x4xf32, #tpu.memory_space<vmem>>, vector<1x16x16x4xf32>
    %25 = vector.shape_cast %24 : vector<1x16x16x4xf32> to vector<16x16x4xf32>
    %c2_i32 = arith.constant 2 : i32
    %26 = arith.addi %1, %c2_i32 : i32
    %c0_19 = arith.constant 0 : index
    %27 = arith.index_cast %26 : i32 to index
    %c0_20 = arith.constant 0 : index
    %c0_21 = arith.constant 0 : index
    %28 = vector.load %arg3[%c0_19, %27, %c0_20, %c0_21] : memref<1x18x18x4xf32, #tpu.memory_space<vmem>>, vector<1x16x16x4xf32>
    %29 = vector.shape_cast %28 : vector<1x16x16x4xf32> to vector<16x16x4xf32>
    %c2_i32_22 = arith.constant 2 : i32
    %30 = arith.addi %1, %c2_i32_22 : i32
    %c0_23 = arith.constant 0 : index
    %31 = arith.index_cast %30 : i32 to index
    %c1_24 = arith.constant 1 : index
    %c0_25 = arith.constant 0 : index
    %32 = vector.load %arg3[%c0_23, %31, %c1_24, %c0_25] : memref<1x18x18x4xf32, #tpu.memory_space<vmem>>, vector<1x16x16x4xf32>
    %33 = vector.shape_cast %32 : vector<1x16x16x4xf32> to vector<16x16x4xf32>
    %c2_i32_26 = arith.constant 2 : i32
    %34 = arith.addi %1, %c2_i32_26 : i32
    %c0_27 = arith.constant 0 : index
    %35 = arith.index_cast %34 : i32 to index
    %c2_28 = arith.constant 2 : index
    %c0_29 = arith.constant 0 : index
    %36 = vector.load %arg3[%c0_27, %35, %c2_28, %c0_29] : memref<1x18x18x4xf32, #tpu.memory_space<vmem>>, vector<1x16x16x4xf32>
    %37 = vector.shape_cast %36 : vector<1x16x16x4xf32> to vector<16x16x4xf32>
    %38 = tpu.concatenate %5, %9, %13, %17, %21, %25, %29, %33, %37 in 2 : vector<16x16x4xf32>, vector<16x16x4xf32>, vector<16x16x4xf32>, vector<16x16x4xf32>, vector<16x16x4xf32>, vector<16x16x4xf32>, vector<16x16x4xf32>, vector<16x16x4xf32>, vector<16x16x4xf32> -> vector<16x16x36xf32>
    %39 = vector.shape_cast %38 : vector<16x16x36xf32> to vector<256x36xf32>
    %c0_30 = arith.constant 0 : index
    %c0_31 = arith.constant 0 : index
    %40 = vector.load %arg4[%c0_30, %c0_31] : memref<36x8xf32, #tpu.memory_space<vmem>>, vector<36x8xf32>
    %cst = arith.constant dense<0.000000e+00> : vector<256x8xf32>
    %41 = tpu.matmul %39, %40, %cst {dimension_numbers = #tpu.dot_dimension_numbers<[1], [0], [0], [1], [0, 0, 1, 1], [], []>} : vector<256x36xf32>, vector<36x8xf32>, vector<256x8xf32> -> vector<256x8xf32>
    %42 = vector.shape_cast %41 : vector<256x8xf32> to vector<16x16x8xf32>
    %c0_32 = arith.constant 0 : index
    %c0_33 = arith.constant 0 : index
    %c0_34 = arith.constant 0 : index
    %c0_35 = arith.constant 0 : index
    %43 = vector.load %arg5[%c0_32, %c0_33, %c0_34, %c0_35] : memref<1x16x16x8xf32, #tpu.memory_space<vmem>>, vector<1x16x16x8xf32>
    %44 = vector.shape_cast %43 : vector<1x16x16x8xf32> to vector<16x16x8xf32>
    %45 = vector.shape_cast %42 : vector<16x16x8xf32> to vector<1x16x16x8xf32>
    tpu.vector_store %arg5[%c0_32, %c0_33, %c0_34, %c0_35], %45 {strides = array<i32>} : memref<1x16x16x8xf32, #tpu.memory_space<vmem>>, vector<1x16x16x8xf32>,
    return
  }
  func.func @transform_0(%arg0: i32, %arg1: i32, %arg2: i32) -> (i32, i32, i32, i32) {
    %c0_i32 = arith.constant 0 : i32
    %c0_i32_0 = arith.constant 0 : i32
    %c0_i32_1 = arith.constant 0 : i32
    %c0_i32_2 = arith.constant 0 : i32
    return %arg0, %c0_i32, %c0_i32_0, %c0_i32_1 : i32, i32, i32, i32
  }
  func.func @transform_1(%arg0: i32, %arg1: i32, %arg2: i32) -> (i32, i32) {
    %c0_i32 = arith.constant 0 : i32
    %c0_i32_0 = arith.constant 0 : i32
    return %c0_i32, %arg1 : i32, i32
  }
  func.func @transform_2(%arg0: i32, %arg1: i32, %arg2: i32) -> (i32, i32, i32, i32) {
    %c0_i32 = arith.constant 0 : i32
    %c0_i32_0 = arith.constant 0 : i32
    return %arg0, %arg2, %c0_i32, %arg1 : i32, i32, i32, i32
  }
}

</mosaic_0001>

<llo_original>
// kernel: conv2d_pallas.1
$region0: #{conv2d_pallas.1}
  #allocation0 [shape = 'u32[]', space=smem, size = 0x4, offset = 0x4, fixed_abs, tag = 'smem constant byte address 0x4 - core index']
  #allocation1 [shape = 'u32[144,128]{1,0:T(1,128)}', space=vmem, size = 0x12000, scoped, tag = 'internal scratch']
  %s0 = inlined_call_operand.vmem [shape: f32[2,18,18,4], index: 0, kind: input, shape index: {}]
  %s1 = inlined_call_operand.vmem [shape: f32[36,8], index: 1, kind: input, shape index: {}]
  %s2 = inlined_call_operand.vmem [shape: f32[2,16,16,8], index: 2, kind: output, shape index: {}]
  %s3 = sld [smem:[#allocation0]]
  $region41: #{conv2d_pallas.1} parent=0
    _
  %s5 = ssub.s32 1, %s3
  %s6 = scalar_select 0, %s5, %s3
  loop: start=0, step=1, limit=4
  $region2: #{conv2d_pallas.1} parent=0 // loop_pre_header
    _
  $region3: #{conv2d_pallas.1} parent=0 // loop_header
    %s8 = sphi 0, %s12
    %p9 = scmp.ge.s32.totalorder %s8, 4
    %s15 = sphi 0, %s34
    %s16 = sphi 0, %s30
    %s17 = sphi 0, %s26
    %s18 = sphi 0, %s15
    %s19 = sphi 0, %s16
    %s20 = sphi 0, %s17
    %s21 = sphi 0, %s18
    %s22 = sphi 0, %s19
    %s23 = sphi 0, %s20
    %s37 = sphi 0, %s39
    %s40 = sphi 0, %s37
    %s41 = sphi 0, %s40
    %s57 = sphi 0, %s41
    %s63 = sphi 0, %s65
    %s66 = sphi 0, %s63
    %s67 = sphi 0, %s66
    %s83 = sphi 0, %s67
    %s93 = sphi 0, %s95
    %s96 = sphi 0, %s93
    %s97 = sphi 0, %s96
    %s113 = sphi 0, %s97
  $region4: #{conv2d_pallas.1} parent=0 // loop_header_branch
    %11 = sbr.rel (%p9) target = $region8
  $region5: #{conv2d_pallas.1} parent=0 // loop_body
    %s13 = ssub.s32 %s8, 1
    %s14 = ssub.s32 %s8, 2
    %s24 = sadd.s32 1, %s17
    %p25 = scmp.ge.s32.totalorder %s24, 1
    %s26 = scalar_select %p25, 0, %s24
    %s27 = sadd.s32 1, %s16
    %s28 = scalar_select %p25, %s27, %s16
    %p29 = scmp.ge.s32.totalorder %s28, 1
    %s30 = scalar_select %p29, 0, %s28
    %s31 = sadd.s32 1, %s15
    %s32 = scalar_select %p29, %s31, %s15
    %p33 = scmp.ge.s32.totalorder %s32, 2
    %s34 = scalar_select %p33, 0, %s32
    %s35 = ssub.s32 %s15, %s34
    %p36 = scmp.eq.s32.totalorder %s35, 0
    %s38 = sadd.s32 %s37, 1
    %s39 = scalar_select %p36, %s37, %s38
    %p42 = pneg %p36
    %p43 = scmp.eq.s32.totalorder %s8, 1
    %p44 = por %p42, %p43
    %p45 = scmp.ne.s32.totalorder %s37, %s40
    %p46 = scmp.eq.s32.totalorder %s8, 0
    %p47 = por %p45, %p46
    %p48 = scmp.ne.s32.totalorder %s37, %s40
    %p49 = scmp.eq.s32.totalorder %s13, 1
    %p50 = por %p48, %p49
    %p51 = scmp.ne.s32.totalorder %s40, %s41
    %p52 = scmp.eq.s32.totalorder %s13, 0
    %p53 = por %p51, %p52
    %p54 = scmp.ne.s32.totalorder %s40, %s41
    %p55 = scmp.eq.s32.totalorder %s14, 1
    %p56 = por %p54, %p55
    %p58 = scmp.ne.s32.totalorder %s41, %s57
    %p59 = scmp.eq.s32.totalorder %s14, 0
    %p60 = por %p58, %p59
    %s61 = ssub.s32 %s16, %s30
    %p62 = scmp.eq.s32.totalorder %s61, 0
    %s64 = sadd.s32 %s63, 1
    %s65 = scalar_select %p62, %s63, %s64
    %p68 = pneg %p62
    %p69 = scmp.eq.s32.totalorder %s8, 1
    %p70 = por %p68, %p69
    %p71 = scmp.ne.s32.totalorder %s63, %s66
    %p72 = scmp.eq.s32.totalorder %s8, 0
    %p73 = por %p71, %p72
    %p74 = scmp.ne.s32.totalorder %s63, %s66
    %p75 = scmp.eq.s32.totalorder %s13, 1
    %p76 = por %p74, %p75
    %p77 = scmp.ne.s32.totalorder %s66, %s67
    %p78 = scmp.eq.s32.totalorder %s13, 0
    %p79 = por %p77, %p78
    %p80 = scmp.ne.s32.totalorder %s66, %s67
    %p81 = scmp.eq.s32.totalorder %s14, 1
    %p82 = por %p80, %p81
    %p84 = scmp.ne.s32.totalorder %s67, %s83
    %p85 = scmp.eq.s32.totalorder %s14, 0
    %p86 = por %p84, %p85
    %s87 = ssub.s32 %s15, %s34
    %s88 = ssub.s32 %s17, %s26
    %s89 = sor.u32 %s87, %s88
    %s90 = ssub.s32 %s16, %s30
    %s91 = sor.u32 %s89, %s90
    %p92 = scmp.eq.s32.totalorder %s91, 0
    %s94 = sadd.s32 %s93, 1
    %s95 = scalar_select %p92, %s93, %s94
    %p98 = pneg %p92
    %p99 = scmp.eq.s32.totalorder %s8, 1
    %p100 = por %p98, %p99
    %p101 = scmp.ne.s32.totalorder %s93, %s96
    %p102 = scmp.eq.s32.totalorder %s8, 0
    %p103 = por %p101, %p102
    %p104 = scmp.ne.s32.totalorder %s93, %s96
    %p105 = scmp.eq.s32.totalorder %s13, 1
    %p106 = por %p104, %p105
    %p107 = scmp.ne.s32.totalorder %s96, %s97
    %p108 = scmp.eq.s32.totalorder %s13, 0
    %p109 = por %p107, %p108
    %p110 = scmp.ne.s32.totalorder %s96, %s97
    %p111 = scmp.eq.s32.totalorder %s14, 1
    %p112 = por %p110, %p111
    %p114 = scmp.ne.s32.totalorder %s97, %s113
    %p115 = scmp.eq.s32.totalorder %s14, 0
    %p116 = por %p114, %p115
    %p117 = scmp.le.s32.totalorder 1, %s8
    %p118 = scmp.lt.s32.totalorder %s8, 3
    %p119 = pnand %p117, %p118
    %p120 = pneg %p119
    // Predicated region
    $region9: #{conv2d_pallas.1} parent=5 // pred_check
      _
    $region10: #{conv2d_pallas.1} parent=5 // pred_check_branch
      %122 = sbr.rel (%p119) target = $region12
    $region11: #{conv2d_pallas.1} parent=5 // pred_region
      %s123 = ssub.s32 %s8, 1
      // Predicated region
      $region13: #{conv2d_pallas.1} parent=11 // pred_check
        %p124 = pneg %p79
      $region14: #{conv2d_pallas.1} parent=11 // pred_check_branch
        %126 = sbr.rel (%p124) target = $region16
      $region15: #{conv2d_pallas.1} parent=11 // pred_region
        %p127 = scmp.lt.s32.totalorder %s19, 0
        %s128 = scalar_select %p127, %s19, 0
        %s129 = smul.addr %s128, 8
        %s130 = scalar_lea.vmem %s1, %s129
      $region16: #{conv2d_pallas.1} parent=11 // pred_fallthru
        _
    $region12: #{conv2d_pallas.1} parent=5 // pred_fallthru
      _
    %p131 = scmp.lt.s32.totalorder %s8, 2
    // Predicated region
    $region17: #{conv2d_pallas.1} parent=5 // pred_check
      %p132 = pneg %p131
    $region18: #{conv2d_pallas.1} parent=5 // pred_check_branch
      %134 = sbr.rel (%p132) target = $region20
    $region19: #{conv2d_pallas.1} parent=5 // pred_region
      // Predicated region
      $region21: #{conv2d_pallas.1} parent=19 // pred_check
        %p135 = pneg %p47
      $region22: #{conv2d_pallas.1} parent=19 // pred_check_branch
        %137 = sbr.rel (%p135) target = $region24
      $region23: #{conv2d_pallas.1} parent=19 // pred_region
        %p138 = scmp.lt.s32.totalorder %s15, 1
        %s139 = scalar_select %p138, %s15, 1
        %s140 = smul.addr %s139, 54
        %s141 = smul.addr %s140, 8
        %s142 = scalar_lea.vmem %s0, %s141
      $region24: #{conv2d_pallas.1} parent=19 // pred_fallthru
        _
    $region20: #{conv2d_pallas.1} parent=5 // pred_fallthru
      _
    %p143 = scmp.le.s32.totalorder 1, %s8
    %p144 = scmp.lt.s32.totalorder %s8, 3
    %p145 = pnand %p143, %p144
    %p146 = pneg %p145
    // Predicated region
    $region25: #{conv2d_pallas.1} parent=5 // pred_check
      _
    $region26: #{conv2d_pallas.1} parent=5 // pred_check_branch
      %148 = sbr.rel (%p145) target = $region28
    $region27: #{conv2d_pallas.1} parent=5 // pred_region
      %s149 = ssub.s32 %s8, 1
      %p150 = scmp.lt.s32.totalorder %s18, 1
      %s151 = scalar_select %p150, %s18, 1
      %s152 = smul.addr %s151, 54
      %s153 = smul.addr %s152, 8
      %s154 = scalar_lea.vmem %s0, %s153
      %p155 = pneg %p53
      %p156 = pneg %p50
      %p157 = scmp.lt.s32.totalorder %s19, 0
      %s158 = scalar_select %p157, %s19, 0
      %s159 = smul.addr %s158, 8
      %s160 = scalar_lea.vmem %s1, %s159
      %p161 = pneg %p79
      %p162 = pneg %p76
      %p163 = pneg %p109
      %p164 = pneg %p106
      %s165 = smul.u32 16, %s20
      %p166 = scmp.lt.s32.totalorder %s18, 1
      %s167 = scalar_select %p166, %s18, 1
      %p168 = scmp.lt.s32.totalorder %s165, 15
      %s169 = scalar_select %p168, %s165, 15
      %p170 = scmp.lt.s32.totalorder %s19, 0
      %s171 = scalar_select %p170, %s19, 0
      %s172 = smul.addr %s169, 2
      %s173 = sadd.s32 %s171, %s172
      %s174 = smul.addr %s167, 32
      %s175 = sadd.s32 %s173, %s174
      %s176 = smul.addr %s175, 8
      %s177 = scalar_lea.vmem %s2, %s176
      %p178 = scmp.lt.s32.totalorder %s18, 1
      %s179 = scalar_select %p178, %s18, 1
      %s180 = smul.addr %s179, 54
      %s181 = smul.addr %s180, 8
      %s182 = scalar_lea.vmem %s0, %s181
      %p183 = scmp.lt.s32.totalorder %s19, 0
      %s184 = scalar_select %p183, %s19, 0
      %s185 = smul.addr %s184, 8
      %s186 = scalar_lea.vmem %s1, %s185
      %s187 = smul.u32 16, %s20
      %p188 = scmp.lt.s32.totalorder %s18, 1
      %s189 = scalar_select %p188, %s18, 1
      %p190 = scmp.lt.s32.totalorder %s187, 15
      %s191 = scalar_select %p190, %s187, 15
      %p192 = scmp.lt.s32.totalorder %s19, 0
      %s193 = scalar_select %p192, %s19, 0
      %s194 = smul.addr %s191, 2
      %s195 = sadd.s32 %s193, %s194
      %s196 = smul.addr %s189, 32
      %s197 = sadd.s32 %s195, %s196
      %s198 = smul.addr %s197, 8
      %s199 = scalar_lea.vmem %s2, %s198
      %s200 = smul.u32 16, %s20
      %s201 = smul.u32 %s20, 16
      %s202 = smul.u32 %s201, 24
      %s203 = scalar_lea.vmem %s182, %s202
      %v204 = vld [vmem:[%s203] sm:$0xff]
      %v205 = vld [vmem:[%s203 + $0x8] sm:$0xff]
      %v206 = vld [vmem:[%s203 + $0x18] sm:$0xff]
      %v207 = vld [vmem:[%s203 + $0x20] sm:$0xff]
      %v208 = vld [vmem:[%s203 + $0x30] sm:$0xff]
      %v209 = vld [vmem:[%s203 + $0x38] sm:$0xff]
      %v210 = vld [vmem:[%s203 + $0x48] sm:$0xff]
      %v211 = vld [vmem:[%s203 + $0x50] sm:$0xff]
      %v212 = vld [vmem:[%s203 + $0x60] sm:$0xff]
      %v213 = vld [vmem:[%s203 + $0x68] sm:$0xff]
      %v214 = vld [vmem:[%s203 + $0x78] sm:$0xff]
      %v215 = vld [vmem:[%s203 + $0x80] sm:$0xff]
      %v216 = vld [vmem:[%s203 + $0x90] sm:$0xff]
      %v217 = vld [vmem:[%s203 + $0x98] sm:$0xff]
      %v218 = vld [vmem:[%s203 + $0xa8] sm:$0xff]
      %v219 = vld [vmem:[%s203 + $0xb0] sm:$0xff]
      %v220 = vld [vmem:[%s203 + $0xc0] sm:$0xff]
      %v221 = vld [vmem:[%s203 + $0xc8] sm:$0xff]
      %v222 = vld [vmem:[%s203 + $0xd8] sm:$0xff]
      %v223 = vld [vmem:[%s203 + $0xe0] sm:$0xff]
      %v224 = vld [vmem:[%s203 + $0xf0] sm:$0xff]
      %v225 = vld [vmem:[%s203 + $0xf8] sm:$0xff]
      %v226 = vld [vmem:[%s203 + $0x108] sm:$0xff]
      %v227 = vld [vmem:[%s203 + $0x110] sm:$0xff]
      %v228 = vld [vmem:[%s203 + $0x120] sm:$0xff]
      %v229 = vld [vmem:[%s203 + $0x128] sm:$0xff]
      %v230 = vld [vmem:[%s203 + $0x138] sm:$0xff]
      %v231 = vld [vmem:[%s203 + $0x140] sm:$0xff]
      %v232 = vld [vmem:[%s203 + $0x150] sm:$0xff]
      %v233 = vld [vmem:[%s203 + $0x158] sm:$0xff]
      %v234 = vld [vmem:[%s203 + $0x168] sm:$0xff]
      %v235 = vld [vmem:[%s203 + $0x170] sm:$0xff]
      %v236 = vld [vmem:[%s203 + $0x1] sm:$0xff]
      %v237 = vld [vmem:[%s203 + $0x9] sm:$0xff]
      %v238 = vld [vmem:[%s203 + $0x19] sm:$0xff]
      %v239 = vld [vmem:[%s203 + $0x21] sm:$0xff]
      %v240 = vld [vmem:[%s203 + $0x31] sm:$0xff]
      %v241 = vld [vmem:[%s203 + $0x39] sm:$0xff]
      %v242 = vld [vmem:[%s203 + $0x49] sm:$0xff]
      %v243 = vld [vmem:[%s203 + $0x51] sm:$0xff]
      %v244 = vld [vmem:[%s203 + $0x61] sm:$0xff]
      %v245 = vld [vmem:[%s203 + $0x69] sm:$0xff]
      %v246 = vld [vmem:[%s203 + $0x79] sm:$0xff]
      %v247 = vld [vmem:[%s203 + $0x81] sm:$0xff]
      %v248 = vld [vmem:[%s203 + $0x91] sm:$0xff]
      %v249 = vld [vmem:[%s203 + $0x99] sm:$0xff]
      %v250 = vld [vmem:[%s203 + $0xa9] sm:$0xff]
      %v251 = vld [vmem:[%s203 + $0xb1] sm:$0xff]
      %v252 = vld [vmem:[%s203 + $0xc1] sm:$0xff]
      %v253 = vld [vmem:[%s203 + $0xc9] sm:$0xff]
      %v254 = vld [vmem:[%s203 + $0xd9] sm:$0xff]
      %v255 = vld [vmem:[%s203 + $0xe1] sm:$0xff]
      %v256 = vld [vmem:[%s203 + $0xf1] sm:$0xff]
      %v257 = vld [vmem:[%s203 + $0xf9] sm:$0xff]
      %v258 = vld [vmem:[%s203 + $0x109] sm:$0xff]
      %v259 = vld [vmem:[%s203 + $0x111] sm:$0xff]
      %v260 = vld [vmem:[%s203 + $0x121] sm:$0xff]
      %v261 = vld [vmem:[%s203 + $0x129] sm:$0xff]
      %v262 = vld [vmem:[%s203 + $0x139] sm:$0xff]
      %v263 = vld [vmem:[%s203 + $0x141] sm:$0xff]
      %v264 = vld [vmem:[%s203 + $0x151] sm:$0xff]
      %v265 = vld [vmem:[%s203 + $0x159] sm:$0xff]
      %v266 = vld [vmem:[%s203 + $0x169] sm:$0xff]
      %v267 = vld [vmem:[%s203 + $0x171] sm:$0xff]
      %v268 = vld [vmem:[%s203 + $0x2] sm:$0xff]
      %v269 = vld [vmem:[%s203 + $0xa] sm:$0xff]
      %v270 = vld [vmem:[%s203 + $0x1a] sm:$0xff]
      %v271 = vld [vmem:[%s203 + $0x22] sm:$0xff]
      %v272 = vld [vmem:[%s203 + $0x32] sm:$0xff]
      %v273 = vld [vmem:[%s203 + $0x3a] sm:$0xff]
      %v274 = vld [vmem:[%s203 + $0x4a] sm:$0xff]
      %v275 = vld [vmem:[%s203 + $0x52] sm:$0xff]
      %v276 = vld [vmem:[%s203 + $0x62] sm:$0xff]
      %v277 = vld [vmem:[%s203 + $0x6a] sm:$0xff]
      %v278 = vld [vmem:[%s203 + $0x7a] sm:$0xff]
      %v279 = vld [vmem:[%s203 + $0x82] sm:$0xff]
      %v280 = vld [vmem:[%s203 + $0x92] sm:$0xff]
      %v281 = vld [vmem:[%s203 + $0x9a] sm:$0xff]
      %v282 = vld [vmem:[%s203 + $0xaa] sm:$0xff]
      %v283 = vld [vmem:[%s203 + $0xb2] sm:$0xff]
      %v284 = vld [vmem:[%s203 + $0xc2] sm:$0xff]
      %v285 = vld [vmem:[%s203 + $0xca] sm:$0xff]
      %v286 = vld [vmem:[%s203 + $0xda] sm:$0xff]
      %v287 = vld [vmem:[%s203 + $0xe2] sm:$0xff]
      %v288 = vld [vmem:[%s203 + $0xf2] sm:$0xff]
      %v289 = vld [vmem:[%s203 + $0xfa] sm:$0xff]
      %v290 = vld [vmem:[%s203 + $0x10a] sm:$0xff]
      %v291 = vld [vmem:[%s203 + $0x112] sm:$0xff]
      %v292 = vld [vmem:[%s203 + $0x122] sm:$0xff]
      %v293 = vld [vmem:[%s203 + $0x12a] sm:$0xff]
      %v294 = vld [vmem:[%s203 + $0x13a] sm:$0xff]
      %v295 = vld [vmem:[%s203 + $0x142] sm:$0xff]
      %v296 = vld [vmem:[%s203 + $0x152] sm:$0xff]
      %v297 = vld [vmem:[%s203 + $0x15a] sm:$0xff]
      %v298 = vld [vmem:[%s203 + $0x16a] sm:$0xff]
      %v299 = vld [vmem:[%s203 + $0x172] sm:$0xff]
      %s300 = sadd.s32 %s201, 1
      %s301 = smul.u32 %s300, 24
      %s302 = scalar_lea.vmem %s182, %s301
      %v303 = vld [vmem:[%s302] sm:$0xff]
      %v304 = vld [vmem:[%s302 + $0x8] sm:$0xff]
      %v305 = vld [vmem:[%s302 + $0x18] sm:$0xff]
      %v306 = vld [vmem:[%s302 + $0x20] sm:$0xff]
      %v307 = vld [vmem:[%s302 + $0x30] sm:$0xff]
      %v308 = vld [vmem:[%s302 + $0x38] sm:$0xff]
      %v309 = vld [vmem:[%s302 + $0x48] sm:$0xff]
      %v310 = vld [vmem:[%s302 + $0x50] sm:$0xff]
      %v311 = vld [vmem:[%s302 + $0x60] sm:$0xff]
      %v312 = vld [vmem:[%s302 + $0x68] sm:$0xff]
      %v313 = vld [vmem:[%s302 + $0x78] sm:$0xff]
      %v314 = vld [vmem:[%s302 + $0x80] sm:$0xff]
      %v315 = vld [vmem:[%s302 + $0x90] sm:$0xff]
      %v316 = vld [vmem:[%s302 + $0x98] sm:$0xff]
      %v317 = vld [vmem:[%s302 + $0xa8] sm:$0xff]
      %v318 = vld [vmem:[%s302 + $0xb0] sm:$0xff]
      %v319 = vld [vmem:[%s302 + $0xc0] sm:$0xff]
      %v320 = vld [vmem:[%s302 + $0xc8] sm:$0xff]
      %v321 = vld [vmem:[%s302 + $0xd8] sm:$0xff]
      %v322 = vld [vmem:[%s302 + $0xe0] sm:$0xff]
      %v323 = vld [vmem:[%s302 + $0xf0] sm:$0xff]
      %v324 = vld [vmem:[%s302 + $0xf8] sm:$0xff]
      %v325 = vld [vmem:[%s302 + $0x108] sm:$0xff]
      %v326 = vld [vmem:[%s302 + $0x110] sm:$0xff]
      %v327 = vld [vmem:[%s302 + $0x120] sm:$0xff]
      %v328 = vld [vmem:[%s302 + $0x128] sm:$0xff]
      %v329 = vld [vmem:[%s302 + $0x138] sm:$0xff]
      %v330 = vld [vmem:[%s302 + $0x140] sm:$0xff]
      %v331 = vld [vmem:[%s302 + $0x150] sm:$0xff]
      %v332 = vld [vmem:[%s302 + $0x158] sm:$0xff]
      %v333 = vld [vmem:[%s302 + $0x168] sm:$0xff]
      %v334 = vld [vmem:[%s302 + $0x170] sm:$0xff]
      %v335 = vld [vmem:[%s302 + $0x1] sm:$0xff]
      %v336 = vld [vmem:[%s302 + $0x9] sm:$0xff]
      %v337 = vld [vmem:[%s302 + $0x19] sm:$0xff]
      %v338 = vld [vmem:[%s302 + $0x21] sm:$0xff]
      %v339 = vld [vmem:[%s302 + $0x31] sm:$0xff]
      %v340 = vld [vmem:[%s302 + $0x39] sm:$0xff]
      %v341 = vld [vmem:[%s302 + $0x49] sm:$0xff]
      %v342 = vld [vmem:[%s302 + $0x51] sm:$0xff]
      %v343 = vld [vmem:[%s302 + $0x61] sm:$0xff]
      %v344 = vld [vmem:[%s302 + $0x69] sm:$0xff]
      %v345 = vld [vmem:[%s302 + $0x79] sm:$0xff]
      %v346 = vld [vmem:[%s302 + $0x81] sm:$0xff]
      %v347 = vld [vmem:[%s302 + $0x91] sm:$0xff]
      %v348 = vld [vmem:[%s302 + $0x99] sm:$0xff]
      %v349 = vld [vmem:[%s302 + $0xa9] sm:$0xff]
      %v350 = vld [vmem:[%s302 + $0xb1] sm:$0xff]
      %v351 = vld [vmem:[%s302 + $0xc1] sm:$0xff]
      %v352 = vld [vmem:[%s302 + $0xc9] sm:$0xff]
      %v353 = vld [vmem:[%s302 + $0xd9] sm:$0xff]
      %v354 = vld [vmem:[%s302 + $0xe1] sm:$0xff]
      %v355 = vld [vmem:[%s302 + $0xf1] sm:$0xff]
      %v356 = vld [vmem:[%s302 + $0xf9] sm:$0xff]
      %v357 = vld [vmem:[%s302 + $0x109] sm:$0xff]
      %v358 = vld [vmem:[%s302 + $0x111] sm:$0xff]
      %v359 = vld [vmem:[%s302 + $0x121] sm:$0xff]
      %v360 = vld [vmem:[%s302 + $0x129] sm:$0xff]
      %v361 = vld [vmem:[%s302 + $0x139] sm:$0xff]
      %v362 = vld [vmem:[%s302 + $0x141] sm:$0xff]
      %v363 = vld [vmem:[%s302 + $0x151] sm:$0xff]
      %v364 = vld [vmem:[%s302 + $0x159] sm:$0xff]
      %v365 = vld [vmem:[%s302 + $0x169] sm:$0xff]
      %v366 = vld [vmem:[%s302 + $0x171] sm:$0xff]
      %v367 = vld [vmem:[%s302 + $0x2] sm:$0xff]
      %v368 = vld [vmem:[%s302 + $0xa] sm:$0xff]
      %v369 = vld [vmem:[%s302 + $0x1a] sm:$0xff]
      %v370 = vld [vmem:[%s302 + $0x22] sm:$0xff]
      %v371 = vld [vmem:[%s302 + $0x32] sm:$0xff]
      %v372 = vld [vmem:[%s302 + $0x3a] sm:$0xff]
      %v373 = vld [vmem:[%s302 + $0x4a] sm:$0xff]
      %v374 = vld [vmem:[%s302 + $0x52] sm:$0xff]
      %v375 = vld [vmem:[%s302 + $0x62] sm:$0xff]
      %v376 = vld [vmem:[%s302 + $0x6a] sm:$0xff]
      %v377 = vld [vmem:[%s302 + $0x7a] sm:$0xff]
      %v378 = vld [vmem:[%s302 + $0x82] sm:$0xff]
      %v379 = vld [vmem:[%s302 + $0x92] sm:$0xff]
      %v380 = vld [vmem:[%s302 + $0x9a] sm:$0xff]
      %v381 = vld [vmem:[%s302 + $0xaa] sm:$0xff]
      %v382 = vld [vmem:[%s302 + $0xb2] sm:$0xff]
      %v383 = vld [vmem:[%s302 + $0xc2] sm:$0xff]
      %v384 = vld [vmem:[%s302 + $0xca] sm:$0xff]
      %v385 = vld [vmem:[%s302 + $0xda] sm:$0xff]
      %v386 = vld [vmem:[%s302 + $0xe2] sm:$0xff]
      %v387 = vld [vmem:[%s302 + $0xf2] sm:$0xff]
      %v388 = vld [vmem:[%s302 + $0xfa] sm:$0xff]
      %v389 = vld [vmem:[%s302 + $0x10a] sm:$0xff]
      %v390 = vld [vmem:[%s302 + $0x112] sm:$0xff]
      %v391 = vld [vmem:[%s302 + $0x122] sm:$0xff]
      %v392 = vld [vmem:[%s302 + $0x12a] sm:$0xff]
      %v393 = vld [vmem:[%s302 + $0x13a] sm:$0xff]
      %v394 = vld [vmem:[%s302 + $0x142] sm:$0xff]
      %v395 = vld [vmem:[%s302 + $0x152] sm:$0xff]
      %v396 = vld [vmem:[%s302 + $0x15a] sm:$0xff]
      %v397 = vld [vmem:[%s302 + $0x16a] sm:$0xff]
      %v398 = vld [vmem:[%s302 + $0x172] sm:$0xff]
      %s399 = sadd.s32 %s201, 2
      %s400 = smul.u32 %s399, 24
      %s401 = scalar_lea.vmem %s182, %s400
      %v402 = vld [vmem:[%s401] sm:$0xff]
      %v403 = vld [vmem:[%s401 + $0x8] sm:$0xff]
      %v404 = vld [vmem:[%s401 + $0x18] sm:$0xff]
      %v405 = vld [vmem:[%s401 + $0x20] sm:$0xff]
      %v406 = vld [vmem:[%s401 + $0x30] sm:$0xff]
      %v407 = vld [vmem:[%s401 + $0x38] sm:$0xff]
      %v408 = vld [vmem:[%s401 + $0x48] sm:$0xff]
      %v409 = vld [vmem:[%s401 + $0x50] sm:$0xff]
      %v410 = vld [vmem:[%s401 + $0x60] sm:$0xff]
      %v411 = vld [vmem:[%s401 + $0x68] sm:$0xff]
      %v412 = vld [vmem:[%s401 + $0x78] sm:$0xff]
      %v413 = vld [vmem:[%s401 + $0x80] sm:$0xff]
      %v414 = vld [vmem:[%s401 + $0x90] sm:$0xff]
      %v415 = vld [vmem:[%s401 + $0x98] sm:$0xff]
      %v416 = vld [vmem:[%s401 + $0xa8] sm:$0xff]
      %v417 = vld [vmem:[%s401 + $0xb0] sm:$0xff]
      %v418 = vld [vmem:[%s401 + $0xc0] sm:$0xff]
      %v419 = vld [vmem:[%s401 + $0xc8] sm:$0xff]
      %v420 = vld [vmem:[%s401 + $0xd8] sm:$0xff]
      %v421 = vld [vmem:[%s401 + $0xe0] sm:$0xff]
      %v422 = vld [vmem:[%s401 + $0xf0] sm:$0xff]
      %v423 = vld [vmem:[%s401 + $0xf8] sm:$0xff]
      %v424 = vld [vmem:[%s401 + $0x108] sm:$0xff]
      %v425 = vld [vmem:[%s401 + $0x110] sm:$0xff]
      %v426 = vld [vmem:[%s401 + $0x120] sm:$0xff]
      %v427 = vld [vmem:[%s401 + $0x128] sm:$0xff]
      %v428 = vld [vmem:[%s401 + $0x138] sm:$0xff]
      %v429 = vld [vmem:[%s401 + $0x140] sm:$0xff]
      %v430 = vld [vmem:[%s401 + $0x150] sm:$0xff]
      %v431 = vld [vmem:[%s401 + $0x158] sm:$0xff]
      %v432 = vld [vmem:[%s401 + $0x168] sm:$0xff]
      %v433 = vld [vmem:[%s401 + $0x170] sm:$0xff]
      %v434 = vld [vmem:[%s401 + $0x1] sm:$0xff]
      %v435 = vld [vmem:[%s401 + $0x9] sm:$0xff]
      %v436 = vld [vmem:[%s401 + $0x19] sm:$0xff]
      %v437 = vld [vmem:[%s401 + $0x21] sm:$0xff]
      %v438 = vld [vmem:[%s401 + $0x31] sm:$0xff]
      %v439 = vld [vmem:[%s401 + $0x39] sm:$0xff]
      %v440 = vld [vmem:[%s401 + $0x49] sm:$0xff]
      %v441 = vld [vmem:[%s401 + $0x51] sm:$0xff]
      %v442 = vld [vmem:[%s401 + $0x61] sm:$0xff]
      %v443 = vld [vmem:[%s401 + $0x69] sm:$0xff]
      %v444 = vld [vmem:[%s401 + $0x79] sm:$0xff]
      %v445 = vld [vmem:[%s401 + $0x81] sm:$0xff]
      %v446 = vld [vmem:[%s401 + $0x91] sm:$0xff]
      %v447 = vld [vmem:[%s401 + $0x99] sm:$0xff]
      %v448 = vld [vmem:[%s401 + $0xa9] sm:$0xff]
      %v449 = vld [vmem:[%s401 + $0xb1] sm:$0xff]
      %v450 = vld [vmem:[%s401 + $0xc1] sm:$0xff]
      %v451 = vld [vmem:[%s401 + $0xc9] sm:$0xff]
      %v452 = vld [vmem:[%s401 + $0xd9] sm:$0xff]
      %v453 = vld [vmem:[%s401 + $0xe1] sm:$0xff]
      %v454 = vld [vmem:[%s401 + $0xf1] sm:$0xff]
      %v455 = vld [vmem:[%s401 + $0xf9] sm:$0xff]
      %v456 = vld [vmem:[%s401 + $0x109] sm:$0xff]
      %v457 = vld [vmem:[%s401 + $0x111] sm:$0xff]
      %v458 = vld [vmem:[%s401 + $0x121] sm:$0xff]
      %v459 = vld [vmem:[%s401 + $0x129] sm:$0xff]
      %v460 = vld [vmem:[%s401 + $0x139] sm:$0xff]
      %v461 = vld [vmem:[%s401 + $0x141] sm:$0xff]
      %v462 = vld [vmem:[%s401 + $0x151] sm:$0xff]
      %v463 = vld [vmem:[%s401 + $0x159] sm:$0xff]
      %v464 = vld [vmem:[%s401 + $0x169] sm:$0xff]
      %v465 = vld [vmem:[%s401 + $0x171] sm:$0xff]
      %v466 = vld [vmem:[%s401 + $0x2] sm:$0xff]
      %v467 = vld [vmem:[%s401 + $0xa] sm:$0xff]
      %v468 = vld [vmem:[%s401 + $0x1a] sm:$0xff]
      %v469 = vld [vmem:[%s401 + $0x22] sm:$0xff]
      %v470 = vld [vmem:[%s401 + $0x32] sm:$0xff]
      %v471 = vld [vmem:[%s401 + $0x3a] sm:$0xff]
      %v472 = vld [vmem:[%s401 + $0x4a] sm:$0xff]
      %v473 = vld [vmem:[%s401 + $0x52] sm:$0xff]
      %v474 = vld [vmem:[%s401 + $0x62] sm:$0xff]
      %v475 = vld [vmem:[%s401 + $0x6a] sm:$0xff]
      %v476 = vld [vmem:[%s401 + $0x7a] sm:$0xff]
      %v477 = vld [vmem:[%s401 + $0x82] sm:$0xff]
      %v478 = vld [vmem:[%s401 + $0x92] sm:$0xff]
      %v479 = vld [vmem:[%s401 + $0x9a] sm:$0xff]
      %v480 = vld [vmem:[%s401 + $0xaa] sm:$0xff]
      %v481 = vld [vmem:[%s401 + $0xb2] sm:$0xff]
      %v482 = vld [vmem:[%s401 + $0xc2] sm:$0xff]
      %v483 = vld [vmem:[%s401 + $0xca] sm:$0xff]
      %v484 = vld [vmem:[%s401 + $0xda] sm:$0xff]
      %v485 = vld [vmem:[%s401 + $0xe2] sm:$0xff]
      %v486 = vld [vmem:[%s401 + $0xf2] sm:$0xff]
      %v487 = vld [vmem:[%s401 + $0xfa] sm:$0xff]
      %v488 = vld [vmem:[%s401 + $0x10a] sm:$0xff]
      %v489 = vld [vmem:[%s401 + $0x112] sm:$0xff]
      %v490 = vld [vmem:[%s401 + $0x122] sm:$0xff]
      %v491 = vld [vmem:[%s401 + $0x12a] sm:$0xff]
      %v492 = vld [vmem:[%s401 + $0x13a] sm:$0xff]
      %v493 = vld [vmem:[%s401 + $0x142] sm:$0xff]
      %v494 = vld [vmem:[%s401 + $0x152] sm:$0xff]
      %v495 = vld [vmem:[%s401 + $0x15a] sm:$0xff]
      %v496 = vld [vmem:[%s401 + $0x16a] sm:$0xff]
      %v497 = vld [vmem:[%s401 + $0x172] sm:$0xff]
      %530 = vrot.lane.b32.xlu0 %v236, 4
      %v531 = vpop.permute.xlu0 %530
      %532 = vrot.lane.b32.xlu0 %v237, 4
      %v533 = vpop.permute.xlu0 %532
      %534 = vrot.lane.b32.xlu0 %v238, 4
      %v535 = vpop.permute.xlu0 %534
      %536 = vrot.lane.b32.xlu0 %v239, 4
      %v537 = vpop.permute.xlu0 %536
      %538 = vrot.lane.b32.xlu0 %v240, 4
      %v539 = vpop.permute.xlu0 %538
      %540 = vrot.lane.b32.xlu0 %v241, 4
      %v541 = vpop.permute.xlu0 %540
      %542 = vrot.lane.b32.xlu0 %v242, 4
      %v543 = vpop.permute.xlu0 %542
      %544 = vrot.lane.b32.xlu0 %v243, 4
      %v545 = vpop.permute.xlu0 %544
      %546 = vrot.lane.b32.xlu0 %v244, 4
      %v547 = vpop.permute.xlu0 %546
      %548 = vrot.lane.b32.xlu0 %v245, 4
      %v549 = vpop.permute.xlu0 %548
      %550 = vrot.lane.b32.xlu0 %v246, 4
      %v551 = vpop.permute.xlu0 %550
      %552 = vrot.lane.b32.xlu0 %v247, 4
      %v553 = vpop.permute.xlu0 %552
      %554 = vrot.lane.b32.xlu0 %v248, 4
      %v555 = vpop.permute.xlu0 %554
      %556 = vrot.lane.b32.xlu0 %v249, 4
      %v557 = vpop.permute.xlu0 %556
      %558 = vrot.lane.b32.xlu0 %v250, 4
      %v559 = vpop.permute.xlu0 %558
      %560 = vrot.lane.b32.xlu0 %v251, 4
      %v561 = vpop.permute.xlu0 %560
      %562 = vrot.lane.b32.xlu0 %v252, 4
      %v563 = vpop.permute.xlu0 %562
      %564 = vrot.lane.b32.xlu0 %v253, 4
      %v565 = vpop.permute.xlu0 %564
      %566 = vrot.lane.b32.xlu0 %v254, 4
      %v567 = vpop.permute.xlu0 %566
      %568 = vrot.lane.b32.xlu0 %v255, 4
      %v569 = vpop.permute.xlu0 %568
      %570 = vrot.lane.b32.xlu0 %v256, 4
      %v571 = vpop.permute.xlu0 %570
      %572 = vrot.lane.b32.xlu0 %v257, 4
      %v573 = vpop.permute.xlu0 %572
      %574 = vrot.lane.b32.xlu0 %v258, 4
      %v575 = vpop.permute.xlu0 %574
      %576 = vrot.lane.b32.xlu0 %v259, 4
      %v577 = vpop.permute.xlu0 %576
      %578 = vrot.lane.b32.xlu0 %v260, 4
      %v579 = vpop.permute.xlu0 %578
      %580 = vrot.lane.b32.xlu0 %v261, 4
      %v581 = vpop.permute.xlu0 %580
      %582 = vrot.lane.b32.xlu0 %v262, 4
      %v583 = vpop.permute.xlu0 %582
      %584 = vrot.lane.b32.xlu0 %v263, 4
      %v585 = vpop.permute.xlu0 %584
      %586 = vrot.lane.b32.xlu0 %v264, 4
      %v587 = vpop.permute.xlu0 %586
      %588 = vrot.lane.b32.xlu0 %v265, 4
      %v589 = vpop.permute.xlu0 %588
      %590 = vrot.lane.b32.xlu0 %v266, 4
      %v591 = vpop.permute.xlu0 %590
      %592 = vrot.lane.b32.xlu0 %v267, 4
      %v593 = vpop.permute.xlu0 %592
      %658 = vrot.lane.b32.xlu0 %v268, 8
      %v659 = vpop.permute.xlu0 %658
      %660 = vrot.lane.b32.xlu0 %v269, 8
      %v661 = vpop.permute.xlu0 %660
      %662 = vrot.lane.b32.xlu0 %v270, 8
      %v663 = vpop.permute.xlu0 %662
      %664 = vrot.lane.b32.xlu0 %v271, 8
      %v665 = vpop.permute.xlu0 %664
      %666 = vrot.lane.b32.xlu0 %v272, 8
      %v667 = vpop.permute.xlu0 %666
      %668 = vrot.lane.b32.xlu0 %v273, 8
      %v669 = vpop.permute.xlu0 %668
      %670 = vrot.lane.b32.xlu0 %v274, 8
      %v671 = vpop.permute.xlu0 %670
      %672 = vrot.lane.b32.xlu0 %v275, 8
      %v673 = vpop.permute.xlu0 %672
      %674 = vrot.lane.b32.xlu0 %v276, 8
      %v675 = vpop.permute.xlu0 %674
      %676 = vrot.lane.b32.xlu0 %v277, 8
      %v677 = vpop.permute.xlu0 %676
      %678 = vrot.lane.b32.xlu0 %v278, 8
      %v679 = vpop.permute.xlu0 %678
      %680 = vrot.lane.b32.xlu0 %v279, 8
      %v681 = vpop.permute.xlu0 %680
      %682 = vrot.lane.b32.xlu0 %v280, 8
      %v683 = vpop.permute.xlu0 %682
      %684 = vrot.lane.b32.xlu0 %v281, 8
      %v685 = vpop.permute.xlu0 %684
      %686 = vrot.lane.b32.xlu0 %v282, 8
      %v687 = vpop.permute.xlu0 %686
      %688 = vrot.lane.b32.xlu0 %v283, 8
      %v689 = vpop.permute.xlu0 %688
      %690 = vrot.lane.b32.xlu0 %v284, 8
      %v691 = vpop.permute.xlu0 %690
      %692 = vrot.lane.b32.xlu0 %v285, 8
      %v693 = vpop.permute.xlu0 %692
      %694 = vrot.lane.b32.xlu0 %v286, 8
      %v695 = vpop.permute.xlu0 %694
      %696 = vrot.lane.b32.xlu0 %v287, 8
      %v697 = vpop.permute.xlu0 %696
      %698 = vrot.lane.b32.xlu0 %v288, 8
      %v699 = vpop.permute.xlu0 %698
      %700 = vrot.lane.b32.xlu0 %v289, 8
      %v701 = vpop.permute.xlu0 %700
      %702 = vrot.lane.b32.xlu0 %v290, 8
      %v703 = vpop.permute.xlu0 %702
      %704 = vrot.lane.b32.xlu0 %v291, 8
      %v705 = vpop.permute.xlu0 %704
      %706 = vrot.lane.b32.xlu0 %v292, 8
      %v707 = vpop.permute.xlu0 %706
      %708 = vrot.lane.b32.xlu0 %v293, 8
      %v709 = vpop.permute.xlu0 %708
      %710 = vrot.lane.b32.xlu0 %v294, 8
      %v711 = vpop.permute.xlu0 %710
      %712 = vrot.lane.b32.xlu0 %v295, 8
      %v713 = vpop.permute.xlu0 %712
      %714 = vrot.lane.b32.xlu0 %v296, 8
      %v715 = vpop.permute.xlu0 %714
      %716 = vrot.lane.b32.xlu0 %v297, 8
      %v717 = vpop.permute.xlu0 %716
      %718 = vrot.lane.b32.xlu0 %v298, 8
      %v719 = vpop.permute.xlu0 %718
      %720 = vrot.lane.b32.xlu0 %v299, 8
      %v721 = vpop.permute.xlu0 %720
      %786 = vrot.lane.b32.xlu0 %v303, 12
      %v787 = vpop.permute.xlu0 %786
      %788 = vrot.lane.b32.xlu0 %v304, 12
      %v789 = vpop.permute.xlu0 %788
      %790 = vrot.lane.b32.xlu0 %v305, 12
      %v791 = vpop.permute.xlu0 %790
      %792 = vrot.lane.b32.xlu0 %v306, 12
      %v793 = vpop.permute.xlu0 %792
      %794 = vrot.lane.b32.xlu0 %v307, 12
      %v795 = vpop.permute.xlu0 %794
      %796 = vrot.lane.b32.xlu0 %v308, 12
      %v797 = vpop.permute.xlu0 %796
      %798 = vrot.lane.b32.xlu0 %v309, 12
      %v799 = vpop.permute.xlu0 %798
      %800 = vrot.lane.b32.xlu0 %v310, 12
      %v801 = vpop.permute.xlu0 %800
      %802 = vrot.lane.b32.xlu0 %v311, 12
      %v803 = vpop.permute.xlu0 %802
      %804 = vrot.lane.b32.xlu0 %v312, 12
      %v805 = vpop.permute.xlu0 %804
      %806 = vrot.lane.b32.xlu0 %v313, 12
      %v807 = vpop.permute.xlu0 %806
      %808 = vrot.lane.b32.xlu0 %v314, 12
      %v809 = vpop.permute.xlu0 %808
      %810 = vrot.lane.b32.xlu0 %v315, 12
      %v811 = vpop.permute.xlu0 %810
      %812 = vrot.lane.b32.xlu0 %v316, 12
      %v813 = vpop.permute.xlu0 %812
      %814 = vrot.lane.b32.xlu0 %v317, 12
      %v815 = vpop.permute.xlu0 %814
      %816 = vrot.lane.b32.xlu0 %v318, 12
      %v817 = vpop.permute.xlu0 %816
      %818 = vrot.lane.b32.xlu0 %v319, 12
      %v819 = vpop.permute.xlu0 %818
      %820 = vrot.lane.b32.xlu0 %v320, 12
      %v821 = vpop.permute.xlu0 %820
      %822 = vrot.lane.b32.xlu0 %v321, 12
      %v823 = vpop.permute.xlu0 %822
      %824 = vrot.lane.b32.xlu0 %v322, 12
      %v825 = vpop.permute.xlu0 %824
      %826 = vrot.lane.b32.xlu0 %v323, 12
      %v827 = vpop.permute.xlu0 %826
      %828 = vrot.lane.b32.xlu0 %v324, 12
      %v829 = vpop.permute.xlu0 %828
      %830 = vrot.lane.b32.xlu0 %v325, 12
      %v831 = vpop.permute.xlu0 %830
      %832 = vrot.lane.b32.xlu0 %v326, 12
      %v833 = vpop.permute.xlu0 %832
      %834 = vrot.lane.b32.xlu0 %v327, 12
      %v835 = vpop.permute.xlu0 %834
      %836 = vrot.lane.b32.xlu0 %v328, 12
      %v837 = vpop.permute.xlu0 %836
      %838 = vrot.lane.b32.xlu0 %v329, 12
      %v839 = vpop.permute.xlu0 %838
      %840 = vrot.lane.b32.xlu0 %v330, 12
      %v841 = vpop.permute.xlu0 %840
      %842 = vrot.lane.b32.xlu0 %v331, 12
      %v843 = vpop.permute.xlu0 %842
      %844 = vrot.lane.b32.xlu0 %v332, 12
      %v845 = vpop.permute.xlu0 %844
      %846 = vrot.lane.b32.xlu0 %v333, 12
      %v847 = vpop.permute.xlu0 %846
      %848 = vrot.lane.b32.xlu0 %v334, 12
      %v849 = vpop.permute.xlu0 %848
      %914 = vrot.lane.b32.xlu0 %v335, 16
      %v915 = vpop.permute.xlu0 %914
      %916 = vrot.lane.b32.xlu0 %v336, 16
      %v917 = vpop.permute.xlu0 %916
      %918 = vrot.lane.b32.xlu0 %v337, 16
      %v919 = vpop.permute.xlu0 %918
      %920 = vrot.lane.b32.xlu0 %v338, 16
      %v921 = vpop.permute.xlu0 %920
      %922 = vrot.lane.b32.xlu0 %v339, 16
      %v923 = vpop.permute.xlu0 %922
      %924 = vrot.lane.b32.xlu0 %v340, 16
      %v925 = vpop.permute.xlu0 %924
      %926 = vrot.lane.b32.xlu0 %v341, 16
      %v927 = vpop.permute.xlu0 %926
      %928 = vrot.lane.b32.xlu0 %v342, 16
      %v929 = vpop.permute.xlu0 %928
      %930 = vrot.lane.b32.xlu0 %v343, 16
      %v931 = vpop.permute.xlu0 %930
      %932 = vrot.lane.b32.xlu0 %v344, 16
      %v933 = vpop.permute.xlu0 %932
      %934 = vrot.lane.b32.xlu0 %v345, 16
      %v935 = vpop.permute.xlu0 %934
      %936 = vrot.lane.b32.xlu0 %v346, 16
      %v937 = vpop.permute.xlu0 %936
      %938 = vrot.lane.b32.xlu0 %v347, 16
      %v939 = vpop.permute.xlu0 %938
      %940 = vrot.lane.b32.xlu0 %v348, 16
      %v941 = vpop.permute.xlu0 %940
      %942 = vrot.lane.b32.xlu0 %v349, 16
      %v943 = vpop.permute.xlu0 %942
      %944 = vrot.lane.b32.xlu0 %v350, 16
      %v945 = vpop.permute.xlu0 %944
      %946 = vrot.lane.b32.xlu0 %v351, 16
      %v947 = vpop.permute.xlu0 %946
      %948 = vrot.lane.b32.xlu0 %v352, 16
      %v949 = vpop.permute.xlu0 %948
      %950 = vrot.lane.b32.xlu0 %v353, 16
      %v951 = vpop.permute.xlu0 %950
      %952 = vrot.lane.b32.xlu0 %v354, 16
      %v953 = vpop.permute.xlu0 %952
      %954 = vrot.lane.b32.xlu0 %v355, 16
      %v955 = vpop.permute.xlu0 %954
      %956 = vrot.lane.b32.xlu0 %v356, 16
      %v957 = vpop.permute.xlu0 %956
      %958 = vrot.lane.b32.xlu0 %v357, 16
      %v959 = vpop.permute.xlu0 %958
      %960 = vrot.lane.b32.xlu0 %v358, 16
      %v961 = vpop.permute.xlu0 %960
      %962 = vrot.lane.b32.xlu0 %v359, 16
      %v963 = vpop.permute.xlu0 %962
      %964 = vrot.lane.b32.xlu0 %v360, 16
      %v965 = vpop.permute.xlu0 %964
      %966 = vrot.lane.b32.xlu0 %v361, 16
      %v967 = vpop.permute.xlu0 %966
      %968 = vrot.lane.b32.xlu0 %v362, 16
      %v969 = vpop.permute.xlu0 %968
      %970 = vrot.lane.b32.xlu0 %v363, 16
      %v971 = vpop.permute.xlu0 %970
      %972 = vrot.lane.b32.xlu0 %v364, 16
      %v973 = vpop.permute.xlu0 %972
      %974 = vrot.lane.b32.xlu0 %v365, 16
      %v975 = vpop.permute.xlu0 %974
      %976 = vrot.lane.b32.xlu0 %v366, 16
      %v977 = vpop.permute.xlu0 %976
      %1042 = vrot.lane.b32.xlu0 %v367, 20
      %v1043 = vpop.permute.xlu0 %1042
      %1044 = vrot.lane.b32.xlu0 %v368, 20
      %v1045 = vpop.permute.xlu0 %1044
      %1046 = vrot.lane.b32.xlu0 %v369, 20
      %v1047 = vpop.permute.xlu0 %1046
      %1048 = vrot.lane.b32.xlu0 %v370, 20
      %v1049 = vpop.permute.xlu0 %1048
      %1050 = vrot.lane.b32.xlu0 %v371, 20
      %v1051 = vpop.permute.xlu0 %1050
      %1052 = vrot.lane.b32.xlu0 %v372, 20
      %v1053 = vpop.permute.xlu0 %1052
      %1054 = vrot.lane.b32.xlu0 %v373, 20
      %v1055 = vpop.permute.xlu0 %1054
      %1056 = vrot.lane.b32.xlu0 %v374, 20
      %v1057 = vpop.permute.xlu0 %1056
      %1058 = vrot.lane.b32.xlu0 %v375, 20
      %v1059 = vpop.permute.xlu0 %1058
      %1060 = vrot.lane.b32.xlu0 %v376, 20
      %v1061 = vpop.permute.xlu0 %1060
      %1062 = vrot.lane.b32.xlu0 %v377, 20
      %v1063 = vpop.permute.xlu0 %1062
      %1064 = vrot.lane.b32.xlu0 %v378, 20
      %v1065 = vpop.permute.xlu0 %1064
      %1066 = vrot.lane.b32.xlu0 %v379, 20
      %v1067 = vpop.permute.xlu0 %1066
      %1068 = vrot.lane.b32.xlu0 %v380, 20
      %v1069 = vpop.permute.xlu0 %1068
      %1070 = vrot.lane.b32.xlu0 %v381, 20
      %v1071 = vpop.permute.xlu0 %1070
      %1072 = vrot.lane.b32.xlu0 %v382, 20
      %v1073 = vpop.permute.xlu0 %1072
      %1074 = vrot.lane.b32.xlu0 %v383, 20
      %v1075 = vpop.permute.xlu0 %1074
      %1076 = vrot.lane.b32.xlu0 %v384, 20
      %v1077 = vpop.permute.xlu0 %1076
      %1078 = vrot.lane.b32.xlu0 %v385, 20
      %v1079 = vpop.permute.xlu0 %1078
      %1080 = vrot.lane.b32.xlu0 %v386, 20
      %v1081 = vpop.permute.xlu0 %1080
      %1082 = vrot.lane.b32.xlu0 %v387, 20
      %v1083 = vpop.permute.xlu0 %1082
      %1084 = vrot.lane.b32.xlu0 %v388, 20
      %v1085 = vpop.permute.xlu0 %1084
      %1086 = vrot.lane.b32.xlu0 %v389, 20
      %v1087 = vpop.permute.xlu0 %1086
      %1088 = vrot.lane.b32.xlu0 %v390, 20
      %v1089 = vpop.permute.xlu0 %1088
      %1090 = vrot.lane.b32.xlu0 %v391, 20
      %v1091 = vpop.permute.xlu0 %1090
      %1092 = vrot.lane.b32.xlu0 %v392, 20
      %v1093 = vpop.permute.xlu0 %1092
      %1094 = vrot.lane.b32.xlu0 %v393, 20
      %v1095 = vpop.permute.xlu0 %1094
      %1096 = vrot.lane.b32.xlu0 %v394, 20
      %v1097 = vpop.permute.xlu0 %1096
      %1098 = vrot.lane.b32.xlu0 %v395, 20
      %v1099 = vpop.permute.xlu0 %1098
      %1100 = vrot.lane.b32.xlu0 %v396, 20
      %v1101 = vpop.permute.xlu0 %1100
      %1102 = vrot.lane.b32.xlu0 %v397, 20
      %v1103 = vpop.permute.xlu0 %1102
      %1104 = vrot.lane.b32.xlu0 %v398, 20
      %v1105 = vpop.permute.xlu0 %1104
      %1170 = vrot.lane.b32.xlu0 %v402, 24
      %v1171 = vpop.permute.xlu0 %1170
      %1172 = vrot.lane.b32.xlu0 %v403, 24
      %v1173 = vpop.permute.xlu0 %1172
      %1174 = vrot.lane.b32.xlu0 %v404, 24
      %v1175 = vpop.permute.xlu0 %1174
      %1176 = vrot.lane.b32.xlu0 %v405, 24
      %v1177 = vpop.permute.xlu0 %1176
      %1178 = vrot.lane.b32.xlu0 %v406, 24
      %v1179 = vpop.permute.xlu0 %1178
      %1180 = vrot.lane.b32.xlu0 %v407, 24
      %v1181 = vpop.permute.xlu0 %1180
      %1182 = vrot.lane.b32.xlu0 %v408, 24
      %v1183 = vpop.permute.xlu0 %1182
      %1184 = vrot.lane.b32.xlu0 %v409, 24
      %v1185 = vpop.permute.xlu0 %1184
      %1186 = vrot.lane.b32.xlu0 %v410, 24
      %v1187 = vpop.permute.xlu0 %1186
      %1188 = vrot.lane.b32.xlu0 %v411, 24
      %v1189 = vpop.permute.xlu0 %1188
      %1190 = vrot.lane.b32.xlu0 %v412, 24
      %v1191 = vpop.permute.xlu0 %1190
      %1192 = vrot.lane.b32.xlu0 %v413, 24
      %v1193 = vpop.permute.xlu0 %1192
      %1194 = vrot.lane.b32.xlu0 %v414, 24
      %v1195 = vpop.permute.xlu0 %1194
      %1196 = vrot.lane.b32.xlu0 %v415, 24
      %v1197 = vpop.permute.xlu0 %1196
      %1198 = vrot.lane.b32.xlu0 %v416, 24
      %v1199 = vpop.permute.xlu0 %1198
      %1200 = vrot.lane.b32.xlu0 %v417, 24
      %v1201 = vpop.permute.xlu0 %1200
      %1202 = vrot.lane.b32.xlu0 %v418, 24
      %v1203 = vpop.permute.xlu0 %1202
      %1204 = vrot.lane.b32.xlu0 %v419, 24
      %v1205 = vpop.permute.xlu0 %1204
      %1206 = vrot.lane.b32.xlu0 %v420, 24
      %v1207 = vpop.permute.xlu0 %1206
      %1208 = vrot.lane.b32.xlu0 %v421, 24
      %v1209 = vpop.permute.xlu0 %1208
      %1210 = vrot.lane.b32.xlu0 %v422, 24
      %v1211 = vpop.permute.xlu0 %1210
      %1212 = vrot.lane.b32.xlu0 %v423, 24
      %v1213 = vpop.permute.xlu0 %1212
      %1214 = vrot.lane.b32.xlu0 %v424, 24
      %v1215 = vpop.permute.xlu0 %1214
      %1216 = vrot.lane.b32.xlu0 %v425, 24
      %v1217 = vpop.permute.xlu0 %1216
      %1218 = vrot.lane.b32.xlu0 %v426, 24
      %v1219 = vpop.permute.xlu0 %1218
      %1220 = vrot.lane.b32.xlu0 %v427, 24
      %v1221 = vpop.permute.xlu0 %1220
      %1222 = vrot.lane.b32.xlu0 %v428, 24
      %v1223 = vpop.permute.xlu0 %1222
      %1224 = vrot.lane.b32.xlu0 %v429, 24
      %v1225 = vpop.permute.xlu0 %1224
      %1226 = vrot.lane.b32.xlu0 %v430, 24
      %v1227 = vpop.permute.xlu0 %1226
      %1228 = vrot.lane.b32.xlu0 %v431, 24
      %v1229 = vpop.permute.xlu0 %1228
      %1230 = vrot.lane.b32.xlu0 %v432, 24
      %v1231 = vpop.permute.xlu0 %1230
      %1232 = vrot.lane.b32.xlu0 %v433, 24
      %v1233 = vpop.permute.xlu0 %1232
      %1298 = vrot.lane.b32.xlu0 %v434, 28
      %v1299 = vpop.permute.xlu0 %1298
      %1300 = vrot.lane.b32.xlu0 %v435, 28
      %v1301 = vpop.permute.xlu0 %1300
      %1302 = vrot.lane.b32.xlu0 %v436, 28
      %v1303 = vpop.permute.xlu0 %1302
      %1304 = vrot.lane.b32.xlu0 %v437, 28
      %v1305 = vpop.permute.xlu0 %1304
      %1306 = vrot.lane.b32.xlu0 %v438, 28
      %v1307 = vpop.permute.xlu0 %1306
      %1308 = vrot.lane.b32.xlu0 %v439, 28
      %v1309 = vpop.permute.xlu0 %1308
      %1310 = vrot.lane.b32.xlu0 %v440, 28
      %v1311 = vpop.permute.xlu0 %1310
      %1312 = vrot.lane.b32.xlu0 %v441, 28
      %v1313 = vpop.permute.xlu0 %1312
      %1314 = vrot.lane.b32.xlu0 %v442, 28
      %v1315 = vpop.permute.xlu0 %1314
      %1316 = vrot.lane.b32.xlu0 %v443, 28
      %v1317 = vpop.permute.xlu0 %1316
      %1318 = vrot.lane.b32.xlu0 %v444, 28
      %v1319 = vpop.permute.xlu0 %1318
      %1320 = vrot.lane.b32.xlu0 %v445, 28
      %v1321 = vpop.permute.xlu0 %1320
      %1322 = vrot.lane.b32.xlu0 %v446, 28
      %v1323 = vpop.permute.xlu0 %1322
      %1324 = vrot.lane.b32.xlu0 %v447, 28
      %v1325 = vpop.permute.xlu0 %1324
      %1326 = vrot.lane.b32.xlu0 %v448, 28
      %v1327 = vpop.permute.xlu0 %1326
      %1328 = vrot.lane.b32.xlu0 %v449, 28
      %v1329 = vpop.permute.xlu0 %1328
      %1330 = vrot.lane.b32.xlu0 %v450, 28
      %v1331 = vpop.permute.xlu0 %1330
      %1332 = vrot.lane.b32.xlu0 %v451, 28
      %v1333 = vpop.permute.xlu0 %1332
      %1334 = vrot.lane.b32.xlu0 %v452, 28
      %v1335 = vpop.permute.xlu0 %1334
      %1336 = vrot.lane.b32.xlu0 %v453, 28
      %v1337 = vpop.permute.xlu0 %1336
      %1338 = vrot.lane.b32.xlu0 %v454, 28
      %v1339 = vpop.permute.xlu0 %1338
      %1340 = vrot.lane.b32.xlu0 %v455, 28
      %v1341 = vpop.permute.xlu0 %1340
      %1342 = vrot.lane.b32.xlu0 %v456, 28
      %v1343 = vpop.permute.xlu0 %1342
      %1344 = vrot.lane.b32.xlu0 %v457, 28
      %v1345 = vpop.permute.xlu0 %1344
      %1346 = vrot.lane.b32.xlu0 %v458, 28
      %v1347 = vpop.permute.xlu0 %1346
      %1348 = vrot.lane.b32.xlu0 %v459, 28
      %v1349 = vpop.permute.xlu0 %1348
      %1350 = vrot.lane.b32.xlu0 %v460, 28
      %v1351 = vpop.permute.xlu0 %1350
      %1352 = vrot.lane.b32.xlu0 %v461, 28
      %v1353 = vpop.permute.xlu0 %1352
      %1354 = vrot.lane.b32.xlu0 %v462, 28
      %v1355 = vpop.permute.xlu0 %1354
      %1356 = vrot.lane.b32.xlu0 %v463, 28
      %v1357 = vpop.permute.xlu0 %1356
      %1358 = vrot.lane.b32.xlu0 %v464, 28
      %v1359 = vpop.permute.xlu0 %1358
      %1360 = vrot.lane.b32.xlu0 %v465, 28
      %v1361 = vpop.permute.xlu0 %1360
      %1426 = vrot.lane.b32.xlu0 %v466, 32
      %v1427 = vpop.permute.xlu0 %1426
      %1428 = vrot.lane.b32.xlu0 %v467, 32
      %v1429 = vpop.permute.xlu0 %1428
      %1430 = vrot.lane.b32.xlu0 %v468, 32
      %v1431 = vpop.permute.xlu0 %1430
      %1432 = vrot.lane.b32.xlu0 %v469, 32
      %v1433 = vpop.permute.xlu0 %1432
      %1434 = vrot.lane.b32.xlu0 %v470, 32
      %v1435 = vpop.permute.xlu0 %1434
      %1436 = vrot.lane.b32.xlu0 %v471, 32
      %v1437 = vpop.permute.xlu0 %1436
      %1438 = vrot.lane.b32.xlu0 %v472, 32
      %v1439 = vpop.permute.xlu0 %1438
      %1440 = vrot.lane.b32.xlu0 %v473, 32
      %v1441 = vpop.permute.xlu0 %1440
      %1442 = vrot.lane.b32.xlu0 %v474, 32
      %v1443 = vpop.permute.xlu0 %1442
      %1444 = vrot.lane.b32.xlu0 %v475, 32
      %v1445 = vpop.permute.xlu0 %1444
      %1446 = vrot.lane.b32.xlu0 %v476, 32
      %v1447 = vpop.permute.xlu0 %1446
      %1448 = vrot.lane.b32.xlu0 %v477, 32
      %v1449 = vpop.permute.xlu0 %1448
      %1450 = vrot.lane.b32.xlu0 %v478, 32
      %v1451 = vpop.permute.xlu0 %1450
      %1452 = vrot.lane.b32.xlu0 %v479, 32
      %v1453 = vpop.permute.xlu0 %1452
      %1454 = vrot.lane.b32.xlu0 %v480, 32
      %v1455 = vpop.permute.xlu0 %1454
      %1456 = vrot.lane.b32.xlu0 %v481, 32
      %v1457 = vpop.permute.xlu0 %1456
      %1458 = vrot.lane.b32.xlu0 %v482, 32
      %v1459 = vpop.permute.xlu0 %1458
      %1460 = vrot.lane.b32.xlu0 %v483, 32
      %v1461 = vpop.permute.xlu0 %1460
      %1462 = vrot.lane.b32.xlu0 %v484, 32
      %v1463 = vpop.permute.xlu0 %1462
      %1464 = vrot.lane.b32.xlu0 %v485, 32
      %v1465 = vpop.permute.xlu0 %1464
      %1466 = vrot.lane.b32.xlu0 %v486, 32
      %v1467 = vpop.permute.xlu0 %1466
      %1468 = vrot.lane.b32.xlu0 %v487, 32
      %v1469 = vpop.permute.xlu0 %1468
      %1470 = vrot.lane.b32.xlu0 %v488, 32
      %v1471 = vpop.permute.xlu0 %1470
      %1472 = vrot.lane.b32.xlu0 %v489, 32
      %v1473 = vpop.permute.xlu0 %1472
      %1474 = vrot.lane.b32.xlu0 %v490, 32
      %v1475 = vpop.permute.xlu0 %1474
      %1476 = vrot.lane.b32.xlu0 %v491, 32
      %v1477 = vpop.permute.xlu0 %1476
      %1478 = vrot.lane.b32.xlu0 %v492, 32
      %v1479 = vpop.permute.xlu0 %1478
      %1480 = vrot.lane.b32.xlu0 %v493, 32
      %v1481 = vpop.permute.xlu0 %1480
      %1482 = vrot.lane.b32.xlu0 %v494, 32
      %v1483 = vpop.permute.xlu0 %1482
      %1484 = vrot.lane.b32.xlu0 %v495, 32
      %v1485 = vpop.permute.xlu0 %1484
      %1486 = vrot.lane.b32.xlu0 %v496, 32
      %v1487 = vpop.permute.xlu0 %1486
      %1488 = vrot.lane.b32.xlu0 %v497, 32
      %v1489 = vpop.permute.xlu0 %1488
      %vm1522 = vcmask 31744
      %v1523 = vsel %vm1522, %v204, %v531
      %v1524 = vsel %vm1522, %v205, %v533
      %v1525 = vsel %vm1522, %v206, %v535
      %v1526 = vsel %vm1522, %v207, %v537
      %v1527 = vsel %vm1522, %v208, %v539
      %v1528 = vsel %vm1522, %v209, %v541
      %v1529 = vsel %vm1522, %v210, %v543
      %v1530 = vsel %vm1522, %v211, %v545
      %v1531 = vsel %vm1522, %v212, %v547
      %v1532 = vsel %vm1522, %v213, %v549
      %v1533 = vsel %vm1522, %v214, %v551
      %v1534 = vsel %vm1522, %v215, %v553
      %v1535 = vsel %vm1522, %v216, %v555
      %v1536 = vsel %vm1522, %v217, %v557
      %v1537 = vsel %vm1522, %v218, %v559
      %v1538 = vsel %vm1522, %v219, %v561
      %v1539 = vsel %vm1522, %v220, %v563
      %v1540 = vsel %vm1522, %v221, %v565
      %v1541 = vsel %vm1522, %v222, %v567
      %v1542 = vsel %vm1522, %v223, %v569
      %v1543 = vsel %vm1522, %v224, %v571
      %v1544 = vsel %vm1522, %v225, %v573
      %v1545 = vsel %vm1522, %v226, %v575
      %v1546 = vsel %vm1522, %v227, %v577
      %v1547 = vsel %vm1522, %v228, %v579
      %v1548 = vsel %vm1522, %v229, %v581
      %v1549 = vsel %vm1522, %v230, %v583
      %v1550 = vsel %vm1522, %v231, %v585
      %v1551 = vsel %vm1522, %v232, %v587
      %v1552 = vsel %vm1522, %v233, %v589
      %v1553 = vsel %vm1522, %v234, %v591
      %v1554 = vsel %vm1522, %v235, %v593
      %vm1555 = vcmask 64512
      %v1556 = vsel %vm1555, %v1523, %v659
      %v1557 = vsel %vm1555, %v1524, %v661
      %v1558 = vsel %vm1555, %v1525, %v663
      %v1559 = vsel %vm1555, %v1526, %v665
      %v1560 = vsel %vm1555, %v1527, %v667
      %v1561 = vsel %vm1555, %v1528, %v669
      %v1562 = vsel %vm1555, %v1529, %v671
      %v1563 = vsel %vm1555, %v1530, %v673
      %v1564 = vsel %vm1555, %v1531, %v675
      %v1565 = vsel %vm1555, %v1532, %v677
      %v1566 = vsel %vm1555, %v1533, %v679
      %v1567 = vsel %vm1555, %v1534, %v681
      %v1568 = vsel %vm1555, %v1535, %v683
      %v1569 = vsel %vm1555, %v1536, %v685
      %v1570 = vsel %vm1555, %v1537, %v687
      %v1571 = vsel %vm1555, %v1538, %v689
      %v1572 = vsel %vm1555, %v1539, %v691
      %v1573 = vsel %vm1555, %v1540, %v693
      %v1574 = vsel %vm1555, %v1541, %v695
      %v1575 = vsel %vm1555, %v1542, %v697
      %v1576 = vsel %vm1555, %v1543, %v699
      %v1577 = vsel %vm1555, %v1544, %v701
      %v1578 = vsel %vm1555, %v1545, %v703
      %v1579 = vsel %vm1555, %v1546, %v705
      %v1580 = vsel %vm1555, %v1547, %v707
      %v1581 = vsel %vm1555, %v1548, %v709
      %v1582 = vsel %vm1555, %v1549, %v711
      %v1583 = vsel %vm1555, %v1550, %v713
      %v1584 = vsel %vm1555, %v1551, %v715
      %v1585 = vsel %vm1555, %v1552, %v717
      %v1586 = vsel %vm1555, %v1553, %v719
      %v1587 = vsel %vm1555, %v1554, %v721
      %vm1588 = vcmask 97280
      %v1589 = vsel %vm1588, %v1556, %v787
      %v1590 = vsel %vm1588, %v1557, %v789
      %v1591 = vsel %vm1588, %v1558, %v791
      %v1592 = vsel %vm1588, %v1559, %v793
      %v1593 = vsel %vm1588, %v1560, %v795
      %v1594 = vsel %vm1588, %v1561, %v797
      %v1595 = vsel %vm1588, %v1562, %v799
      %v1596 = vsel %vm1588, %v1563, %v801
      %v1597 = vsel %vm1588, %v1564, %v803
      %v1598 = vsel %vm1588, %v1565, %v805
      %v1599 = vsel %vm1588, %v1566, %v807
      %v1600 = vsel %vm1588, %v1567, %v809
      %v1601 = vsel %vm1588, %v1568, %v811
      %v1602 = vsel %vm1588, %v1569, %v813
      %v1603 = vsel %vm1588, %v1570, %v815
      %v1604 = vsel %vm1588, %v1571, %v817
      %v1605 = vsel %vm1588, %v1572, %v819
      %v1606 = vsel %vm1588, %v1573, %v821
      %v1607 = vsel %vm1588, %v1574, %v823
      %v1608 = vsel %vm1588, %v1575, %v825
      %v1609 = vsel %vm1588, %v1576, %v827
      %v1610 = vsel %vm1588, %v1577, %v829
      %v1611 = vsel %vm1588, %v1578, %v831
      %v1612 = vsel %vm1588, %v1579, %v833
      %v1613 = vsel %vm1588, %v1580, %v835
      %v1614 = vsel %vm1588, %v1581, %v837
      %v1615 = vsel %vm1588, %v1582, %v839
      %v1616 = vsel %vm1588, %v1583, %v841
      %v1617 = vsel %vm1588, %v1584, %v843
      %v1618 = vsel %vm1588, %v1585, %v845
      %v1619 = vsel %vm1588, %v1586, %v847
      %v1620 = vsel %vm1588, %v1587, %v849
      %vm1621 = vcmask 130048
      %v1622 = vsel %vm1621, %v1589, %v915
      %v1623 = vsel %vm1621, %v1590, %v917
      %v1624 = vsel %vm1621, %v1591, %v919
      %v1625 = vsel %vm1621, %v1592, %v921
      %v1626 = vsel %vm1621, %v1593, %v923
      %v1627 = vsel %vm1621, %v1594, %v925
      %v1628 = vsel %vm1621, %v1595, %v927
      %v1629 = vsel %vm1621, %v1596, %v929
      %v1630 = vsel %vm1621, %v1597, %v931
      %v1631 = vsel %vm1621, %v1598, %v933
      %v1632 = vsel %vm1621, %v1599, %v935
      %v1633 = vsel %vm1621, %v1600, %v937
      %v1634 = vsel %vm1621, %v1601, %v939
      %v1635 = vsel %vm1621, %v1602, %v941
      %v1636 = vsel %vm1621, %v1603, %v943
      %v1637 = vsel %vm1621, %v1604, %v945
      %v1638 = vsel %vm1621, %v1605, %v947
      %v1639 = vsel %vm1621, %v1606, %v949
      %v1640 = vsel %vm1621, %v1607, %v951
      %v1641 = vsel %vm1621, %v1608, %v953
      %v1642 = vsel %vm1621, %v1609, %v955
      %v1643 = vsel %vm1621, %v1610, %v957
      %v1644 = vsel %vm1621, %v1611, %v959
      %v1645 = vsel %vm1621, %v1612, %v961
      %v1646 = vsel %vm1621, %v1613, %v963
      %v1647 = vsel %vm1621, %v1614, %v965
      %v1648 = vsel %vm1621, %v1615, %v967
      %v1649 = vsel %vm1621, %v1616, %v969
      %v1650 = vsel %vm1621, %v1617, %v971
      %v1651 = vsel %vm1621, %v1618, %v973
      %v1652 = vsel %vm1621, %v1619, %v975
      %v1653 = vsel %vm1621, %v1620, %v977
      %vm1654 = vcmask 162816
      %v1655 = vsel %vm1654, %v1622, %v1043
      %v1656 = vsel %vm1654, %v1623, %v1045
      %v1657 = vsel %vm1654, %v1624, %v1047
      %v1658 = vsel %vm1654, %v1625, %v1049
      %v1659 = vsel %vm1654, %v1626, %v1051
      %v1660 = vsel %vm1654, %v1627, %v1053
      %v1661 = vsel %vm1654, %v1628, %v1055
      %v1662 = vsel %vm1654, %v1629, %v1057
      %v1663 = vsel %vm1654, %v1630, %v1059
      %v1664 = vsel %vm1654, %v1631, %v1061
      %v1665 = vsel %vm1654, %v1632, %v1063
      %v1666 = vsel %vm1654, %v1633, %v1065
      %v1667 = vsel %vm1654, %v1634, %v1067
      %v1668 = vsel %vm1654, %v1635, %v1069
      %v1669 = vsel %vm1654, %v1636, %v1071
      %v1670 = vsel %vm1654, %v1637, %v1073
      %v1671 = vsel %vm1654, %v1638, %v1075
      %v1672 = vsel %vm1654, %v1639, %v1077
      %v1673 = vsel %vm1654, %v1640, %v1079
      %v1674 = vsel %vm1654, %v1641, %v1081
      %v1675 = vsel %vm1654, %v1642, %v1083
      %v1676 = vsel %vm1654, %v1643, %v1085
      %v1677 = vsel %vm1654, %v1644, %v1087
      %v1678 = vsel %vm1654, %v1645, %v1089
      %v1679 = vsel %vm1654, %v1646, %v1091
      %v1680 = vsel %vm1654, %v1647, %v1093
      %v1681 = vsel %vm1654, %v1648, %v1095
      %v1682 = vsel %vm1654, %v1649, %v1097
      %v1683 = vsel %vm1654, %v1650, %v1099
      %v1684 = vsel %vm1654, %v1651, %v1101
      %v1685 = vsel %vm1654, %v1652, %v1103
      %v1686 = vsel %vm1654, %v1653, %v1105
      %vm1687 = vcmask 195584
      %v1688 = vsel %vm1687, %v1655, %v1171
      %v1689 = vsel %vm1687, %v1656, %v1173
      %v1690 = vsel %vm1687, %v1657, %v1175
      %v1691 = vsel %vm1687, %v1658, %v1177
      %v1692 = vsel %vm1687, %v1659, %v1179
      %v1693 = vsel %vm1687, %v1660, %v1181
      %v1694 = vsel %vm1687, %v1661, %v1183
      %v1695 = vsel %vm1687, %v1662, %v1185
      %v1696 = vsel %vm1687, %v1663, %v1187
      %v1697 = vsel %vm1687, %v1664, %v1189
      %v1698 = vsel %vm1687, %v1665, %v1191
      %v1699 = vsel %vm1687, %v1666, %v1193
      %v1700 = vsel %vm1687, %v1667, %v1195
      %v1701 = vsel %vm1687, %v1668, %v1197
      %v1702 = vsel %vm1687, %v1669, %v1199
      %v1703 = vsel %vm1687, %v1670, %v1201
      %v1704 = vsel %vm1687, %v1671, %v1203
      %v1705 = vsel %vm1687, %v1672, %v1205
      %v1706 = vsel %vm1687, %v1673, %v1207
      %v1707 = vsel %vm1687, %v1674, %v1209
      %v1708 = vsel %vm1687, %v1675, %v1211
      %v1709 = vsel %vm1687, %v1676, %v1213
      %v1710 = vsel %vm1687, %v1677, %v1215
      %v1711 = vsel %vm1687, %v1678, %v1217
      %v1712 = vsel %vm1687, %v1679, %v1219
      %v1713 = vsel %vm1687, %v1680, %v1221
      %v1714 = vsel %vm1687, %v1681, %v1223
      %v1715 = vsel %vm1687, %v1682, %v1225
      %v1716 = vsel %vm1687, %v1683, %v1227
      %v1717 = vsel %vm1687, %v1684, %v1229
      %v1718 = vsel %vm1687, %v1685, %v1231
      %v1719 = vsel %vm1687, %v1686, %v1233
      %vm1720 = vcmask 228352
      %v1721 = vsel %vm1720, %v1688, %v1299
      %v1722 = vsel %vm1720, %v1689, %v1301
      %v1723 = vsel %vm1720, %v1690, %v1303
      %v1724 = vsel %vm1720, %v1691, %v1305
      %v1725 = vsel %vm1720, %v1692, %v1307
      %v1726 = vsel %vm1720, %v1693, %v1309
      %v1727 = vsel %vm1720, %v1694, %v1311
      %v1728 = vsel %vm1720, %v1695, %v1313
      %v1729 = vsel %vm1720, %v1696, %v1315
      %v1730 = vsel %vm1720, %v1697, %v1317
      %v1731 = vsel %vm1720, %v1698, %v1319
      %v1732 = vsel %vm1720, %v1699, %v1321
      %v1733 = vsel %vm1720, %v1700, %v1323
      %v1734 = vsel %vm1720, %v1701, %v1325
      %v1735 = vsel %vm1720, %v1702, %v1327
      %v1736 = vsel %vm1720, %v1703, %v1329
      %v1737 = vsel %vm1720, %v1704, %v1331
      %v1738 = vsel %vm1720, %v1705, %v1333
      %v1739 = vsel %vm1720, %v1706, %v1335
      %v1740 = vsel %vm1720, %v1707, %v1337
      %v1741 = vsel %vm1720, %v1708, %v1339
      %v1742 = vsel %vm1720, %v1709, %v1341
      %v1743 = vsel %vm1720, %v1710, %v1343
      %v1744 = vsel %vm1720, %v1711, %v1345
      %v1745 = vsel %vm1720, %v1712, %v1347
      %v1746 = vsel %vm1720, %v1713, %v1349
      %v1747 = vsel %vm1720, %v1714, %v1351
      %v1748 = vsel %vm1720, %v1715, %v1353
      %v1749 = vsel %vm1720, %v1716, %v1355
      %v1750 = vsel %vm1720, %v1717, %v1357
      %v1751 = vsel %vm1720, %v1718, %v1359
      %v1752 = vsel %vm1720, %v1719, %v1361
      %vm1753 = vcmask 261120
      %v1754 = vsel %vm1753, %v1721, %v1427
      %v1755 = vsel %vm1753, %v1722, %v1429
      %v1756 = vsel %vm1753, %v1723, %v1431
      %v1757 = vsel %vm1753, %v1724, %v1433
      %v1758 = vsel %vm1753, %v1725, %v1435
      %v1759 = vsel %vm1753, %v1726, %v1437
      %v1760 = vsel %vm1753, %v1727, %v1439
      %v1761 = vsel %vm1753, %v1728, %v1441
      %v1762 = vsel %vm1753, %v1729, %v1443
      %v1763 = vsel %vm1753, %v1730, %v1445
      %v1764 = vsel %vm1753, %v1731, %v1447
      %v1765 = vsel %vm1753, %v1732, %v1449
      %v1766 = vsel %vm1753, %v1733, %v1451
      %v1767 = vsel %vm1753, %v1734, %v1453
      %v1768 = vsel %vm1753, %v1735, %v1455
      %v1769 = vsel %vm1753, %v1736, %v1457
      %v1770 = vsel %vm1753, %v1737, %v1459
      %v1771 = vsel %vm1753, %v1738, %v1461
      %v1772 = vsel %vm1753, %v1739, %v1463
      %v1773 = vsel %vm1753, %v1740, %v1465
      %v1774 = vsel %vm1753, %v1741, %v1467
      %v1775 = vsel %vm1753, %v1742, %v1469
      %v1776 = vsel %vm1753, %v1743, %v1471
      %v1777 = vsel %vm1753, %v1744, %v1473
      %v1778 = vsel %vm1753, %v1745, %v1475
      %v1779 = vsel %vm1753, %v1746, %v1477
      %v1780 = vsel %vm1753, %v1747, %v1479
      %v1781 = vsel %vm1753, %v1748, %v1481
      %v1782 = vsel %vm1753, %v1749, %v1483
      %v1783 = vsel %vm1753, %v1750, %v1485
      %v1784 = vsel %vm1753, %v1751, %v1487
      %v1785 = vsel %vm1753, %v1752, %v1489
      %v1786 = vld [vmem:[%s186] sm:$0xff]
      %v1787 = vld [vmem:[%s186 + $0x8] sm:$0xff]
      %v1788 = vld [vmem:[%s186 + $0x10] sm:$0xff]
      %v1789 = vld [vmem:[%s186 + $0x18] sm:$0xff]
      %v1790 = vld [vmem:[%s186 + $0x20] sm:$0xf]
      %vm1791 = vcmask 293888
      %v1793 = vsel %vm1791, %v1754, 0
      %v1796 = vsel %vm1791, %v1755, 0
      %v1799 = vsel %vm1791, %v1756, 0
      %v1802 = vsel %vm1791, %v1757, 0
      %v1805 = vsel %vm1791, %v1758, 0
      %v1808 = vsel %vm1791, %v1759, 0
      %v1811 = vsel %vm1791, %v1760, 0
      %v1814 = vsel %vm1791, %v1761, 0
      %v1817 = vsel %vm1791, %v1762, 0
      %v1820 = vsel %vm1791, %v1763, 0
      %v1823 = vsel %vm1791, %v1764, 0
      %v1826 = vsel %vm1791, %v1765, 0
      %v1829 = vsel %vm1791, %v1766, 0
      %v1832 = vsel %vm1791, %v1767, 0
      %v1835 = vsel %vm1791, %v1768, 0
      %v1838 = vsel %vm1791, %v1769, 0
      %v1841 = vsel %vm1791, %v1770, 0
      %v1844 = vsel %vm1791, %v1771, 0
      %v1847 = vsel %vm1791, %v1772, 0
      %v1850 = vsel %vm1791, %v1773, 0
      %v1853 = vsel %vm1791, %v1774, 0
      %v1856 = vsel %vm1791, %v1775, 0
      %v1859 = vsel %vm1791, %v1776, 0
      %v1862 = vsel %vm1791, %v1777, 0
      %v1865 = vsel %vm1791, %v1778, 0
      %v1868 = vsel %vm1791, %v1779, 0
      %v1871 = vsel %vm1791, %v1780, 0
      %v1874 = vsel %vm1791, %v1781, 0
      %v1877 = vsel %vm1791, %v1782, 0
      %v1880 = vsel %vm1791, %v1783, 0
      %v1883 = vsel %vm1791, %v1784, 0
      %v1886 = vsel %vm1791, %v1785, 0
      %vm1888 = vcmask 1043456
      %v1890 = vsel %vm1888, %v1790, 0
      %1892 = vmatprep.subr.mxu0 0.0
      %1893 = vmatpush1.msra.mxu0 %v1786
      %1894 = vmatprep.subr.mxu0 0.0
      %1895 = vmatpush1.msra.mxu0 %v1787
      %1896 = vmatprep.subr.mxu0 0.0
      %1897 = vmatpush1.msra.mxu0 %v1788
      %1898 = vmatprep.subr.mxu0 0.0
      %1899 = vmatpush1.msra.mxu0 %v1789
      %1900 = vmatprep.subr.mxu0 0.0
      %1901 = vmatpush1.msra.mxu0 %v1890
      %1902 = vmatprep.subr.mxu0 0.0
      %1903 = vmatpush1.msra.mxu0 0.0
      %1904 = vmatprep.subr.mxu0 0.0
      %1905 = vmatpush1.msra.mxu0 0.0
      %1906 = vmatprep.subr.mxu0 0.0
      %1907 = vmatpush1.msra.mxu0 0.0
      %1908 = vmatprep.subr.mxu0 0.0
      %1909 = vmatpush1.msra.mxu0 0.0
      %1910 = vmatprep.subr.mxu0 0.0
      %1911 = vmatpush1.msra.mxu0 0.0
      %1912 = vmatprep.subr.mxu0 0.0
      %1913 = vmatpush1.msra.mxu0 0.0
      %1914 = vmatprep.subr.mxu0 0.0
      %1915 = vmatpush1.msra.mxu0 0.0
      %1916 = vmatprep.subr.mxu0 0.0
      %1917 = vmatpush1.msra.mxu0 0.0
      %1918 = vmatprep.subr.mxu0 0.0
      %1919 = vmatpush1.msra.mxu0 0.0
      %1920 = vmatprep.subr.mxu0 0.0
      %1921 = vmatpush1.msra.mxu0 0.0
      %1922 = vmatprep.subr.mxu0 0.0
      %1923 = vmatpush1.msra.mxu0 0.0
      %1924 = vmatprep.subr.mxu0 0.0
      %1925 = vmatpush1.msra.mxu0 0.0
      %1926 = vmatprep.subr.mxu0 0.0
      %1927 = vmatpush1.msra.mxu0 0.0
      %1928 = vmatprep.subr.mxu0 0.0
      %1929 = vmatpush1.msra.mxu0 0.0
      %1930 = vmatprep.subr.mxu0 0.0
      %1931 = vmatpush1.msra.mxu0 0.0
      %1932 = vmatprep.subr.mxu0 0.0
      %1933 = vmatpush1.msra.mxu0 0.0
      %1934 = vmatprep.subr.mxu0 0.0
      %1935 = vmatpush1.msra.mxu0 0.0
      %1936 = vmatprep.subr.mxu0 0.0
      %1937 = vmatpush1.msra.mxu0 0.0
      %1938 = vmatprep.subr.mxu0 0.0
      %1939 = vmatpush1.msra.mxu0 0.0
      %1940 = vmatprep.subr.mxu0 0.0
      %1941 = vmatpush1.msra.mxu0 0.0
      %1942 = vmatprep.subr.mxu0 0.0
      %1943 = vmatpush1.msra.mxu0 0.0
      %1944 = vmatprep.subr.mxu0 0.0
      %1945 = vmatpush1.msra.mxu0 0.0
      %1946 = vmatprep.subr.mxu0 0.0
      %1947 = vmatpush1.msra.mxu0 0.0
      %1948 = vmatprep.subr.mxu0 0.0
      %1949 = vmatpush1.msra.mxu0 0.0
      %1950 = vmatprep.subr.mxu0 0.0
      %1951 = vmatpush1.msra.mxu0 0.0
      %1952 = vmatprep.subr.mxu0 0.0
      %1953 = vmatpush1.msra.mxu0 0.0
      %1954 = vmatprep.subr.mxu0 0.0
      %1955 = vmatpush1.msra.mxu0 0.0
      %1956 = vmatprep.mubr.f32.mxu0 0.0
      %1957 = vmatmul.mubr.f32.gmra.mrb[0].mxu0 %v1793
      %v1958 = vpop.f32.mrb[0].mxu0
      %v1959 = vadd.f32 0.0, %v1958
      %v1960 = vpop.f32.mrb[0].mxu0
      %1961 = vmatprep.mubr.f32.mxu0 0.0
      %1962 = vmatmul.mubr.f32.gmra.mrb[0].mxu0 %v1796
      %v1963 = vpop.f32.mrb[0].mxu0
      %v1964 = vadd.f32 0.0, %v1963
      %v1965 = vpop.f32.mrb[0].mxu0
      %1966 = vmatprep.mubr.f32.mxu0 0.0
      %1967 = vmatmul.mubr.f32.gmra.mrb[0].mxu0 %v1799
      %v1968 = vpop.f32.mrb[0].mxu0
      %v1969 = vadd.f32 0.0, %v1968
      %v1970 = vpop.f32.mrb[0].mxu0
      %1971 = vmatprep.mubr.f32.mxu0 0.0
      %1972 = vmatmul.mubr.f32.gmra.mrb[0].mxu0 %v1802
      %v1973 = vpop.f32.mrb[0].mxu0
      %v1974 = vadd.f32 0.0, %v1973
      %v1975 = vpop.f32.mrb[0].mxu0
      %1976 = vmatprep.mubr.f32.mxu0 0.0
      %1977 = vmatmul.mubr.f32.gmra.mrb[0].mxu0 %v1805
      %v1978 = vpop.f32.mrb[0].mxu0
      %v1979 = vadd.f32 0.0, %v1978
      %v1980 = vpop.f32.mrb[0].mxu0
      %1981 = vmatprep.mubr.f32.mxu0 0.0
      %1982 = vmatmul.mubr.f32.gmra.mrb[0].mxu0 %v1808
      %v1983 = vpop.f32.mrb[0].mxu0
      %v1984 = vadd.f32 0.0, %v1983
      %v1985 = vpop.f32.mrb[0].mxu0
      %1986 = vmatprep.mubr.f32.mxu0 0.0
      %1987 = vmatmul.mubr.f32.gmra.mrb[0].mxu0 %v1811
      %v1988 = vpop.f32.mrb[0].mxu0
      %v1989 = vadd.f32 0.0, %v1988
      %v1990 = vpop.f32.mrb[0].mxu0
      %1991 = vmatprep.mubr.f32.mxu0 0.0
      %1992 = vmatmul.mubr.f32.gmra.mrb[0].mxu0 %v1814
      %v1993 = vpop.f32.mrb[0].mxu0
      %v1994 = vadd.f32 0.0, %v1993
      %v1995 = vpop.f32.mrb[0].mxu0
      %1996 = vmatprep.mubr.f32.mxu0 0.0
      %1997 = vmatmul.mubr.f32.gmra.mrb[0].mxu0 %v1817
      %v1998 = vpop.f32.mrb[0].mxu0
      %v1999 = vadd.f32 0.0, %v1998
      %v2000 = vpop.f32.mrb[0].mxu0
      %2001 = vmatprep.mubr.f32.mxu0 0.0
      %2002 = vmatmul.mubr.f32.gmra.mrb[0].mxu0 %v1820
      %v2003 = vpop.f32.mrb[0].mxu0
      %v2004 = vadd.f32 0.0, %v2003
      %v2005 = vpop.f32.mrb[0].mxu0
      %2006 = vmatprep.mubr.f32.mxu0 0.0
      %2007 = vmatmul.mubr.f32.gmra.mrb[0].mxu0 %v1823
      %v2008 = vpop.f32.mrb[0].mxu0
      %v2009 = vadd.f32 0.0, %v2008
      %v2010 = vpop.f32.mrb[0].mxu0
      %2011 = vmatprep.mubr.f32.mxu0 0.0
      %2012 = vmatmul.mubr.f32.gmra.mrb[0].mxu0 %v1826
      %v2013 = vpop.f32.mrb[0].mxu0
      %v2014 = vadd.f32 0.0, %v2013
      %v2015 = vpop.f32.mrb[0].mxu0
      %2016 = vmatprep.mubr.f32.mxu0 0.0
      %2017 = vmatmul.mubr.f32.gmra.mrb[0].mxu0 %v1829
      %v2018 = vpop.f32.mrb[0].mxu0
      %v2019 = vadd.f32 0.0, %v2018
      %v2020 = vpop.f32.mrb[0].mxu0
      %2021 = vmatprep.mubr.f32.mxu0 0.0
      %2022 = vmatmul.mubr.f32.gmra.mrb[0].mxu0 %v1832
      %v2023 = vpop.f32.mrb[0].mxu0
      %v2024 = vadd.f32 0.0, %v2023
      %v2025 = vpop.f32.mrb[0].mxu0
      %2026 = vmatprep.mubr.f32.mxu0 0.0
      %2027 = vmatmul.mubr.f32.gmra.mrb[0].mxu0 %v1835
      %v2028 = vpop.f32.mrb[0].mxu0
      %v2029 = vadd.f32 0.0, %v2028
      %v2030 = vpop.f32.mrb[0].mxu0
      %2031 = vmatprep.mubr.f32.mxu0 0.0
      %2032 = vmatmul.mubr.f32.gmra.mrb[0].mxu0 %v1838
      %v2033 = vpop.f32.mrb[0].mxu0
      %v2034 = vadd.f32 0.0, %v2033
      %v2035 = vpop.f32.mrb[0].mxu0
      %2036 = vmatprep.mubr.f32.mxu0 0.0
      %2037 = vmatmul.mubr.f32.gmra.mrb[0].mxu0 %v1841
      %v2038 = vpop.f32.mrb[0].mxu0
      %v2039 = vadd.f32 0.0, %v2038
      %v2040 = vpop.f32.mrb[0].mxu0
      %2041 = vmatprep.mubr.f32.mxu0 0.0
      %2042 = vmatmul.mubr.f32.gmra.mrb[0].mxu0 %v1844
      %v2043 = vpop.f32.mrb[0].mxu0
      %v2044 = vadd.f32 0.0, %v2043
      %v2045 = vpop.f32.mrb[0].mxu0
      %2046 = vmatprep.mubr.f32.mxu0 0.0
      %2047 = vmatmul.mubr.f32.gmra.mrb[0].mxu0 %v1847
      %v2048 = vpop.f32.mrb[0].mxu0
      %v2049 = vadd.f32 0.0, %v2048
      %v2050 = vpop.f32.mrb[0].mxu0
      %2051 = vmatprep.mubr.f32.mxu0 0.0
      %2052 = vmatmul.mubr.f32.gmra.mrb[0].mxu0 %v1850
      %v2053 = vpop.f32.mrb[0].mxu0
      %v2054 = vadd.f32 0.0, %v2053
      %v2055 = vpop.f32.mrb[0].mxu0
      %2056 = vmatprep.mubr.f32.mxu0 0.0
      %2057 = vmatmul.mubr.f32.gmra.mrb[0].mxu0 %v1853
      %v2058 = vpop.f32.mrb[0].mxu0
      %v2059 = vadd.f32 0.0, %v2058
      %v2060 = vpop.f32.mrb[0].mxu0
      %2061 = vmatprep.mubr.f32.mxu0 0.0
      %2062 = vmatmul.mubr.f32.gmra.mrb[0].mxu0 %v1856
      %v2063 = vpop.f32.mrb[0].mxu0
      %v2064 = vadd.f32 0.0, %v2063
      %v2065 = vpop.f32.mrb[0].mxu0
      %2066 = vmatprep.mubr.f32.mxu0 0.0
      %2067 = vmatmul.mubr.f32.gmra.mrb[0].mxu0 %v1859
      %v2068 = vpop.f32.mrb[0].mxu0
      %v2069 = vadd.f32 0.0, %v2068
      %v2070 = vpop.f32.mrb[0].mxu0
      %2071 = vmatprep.mubr.f32.mxu0 0.0
      %2072 = vmatmul.mubr.f32.gmra.mrb[0].mxu0 %v1862
      %v2073 = vpop.f32.mrb[0].mxu0
      %v2074 = vadd.f32 0.0, %v2073
      %v2075 = vpop.f32.mrb[0].mxu0
      %2076 = vmatprep.mubr.f32.mxu0 0.0
      %2077 = vmatmul.mubr.f32.gmra.mrb[0].mxu0 %v1865
      %v2078 = vpop.f32.mrb[0].mxu0
      %v2079 = vadd.f32 0.0, %v2078
      %v2080 = vpop.f32.mrb[0].mxu0
      %2081 = vmatprep.mubr.f32.mxu0 0.0
      %2082 = vmatmul.mubr.f32.gmra.mrb[0].mxu0 %v1868
      %v2083 = vpop.f32.mrb[0].mxu0
      %v2084 = vadd.f32 0.0, %v2083
      %v2085 = vpop.f32.mrb[0].mxu0
      %2086 = vmatprep.mubr.f32.mxu0 0.0
      %2087 = vmatmul.mubr.f32.gmra.mrb[0].mxu0 %v1871
      %v2088 = vpop.f32.mrb[0].mxu0
      %v2089 = vadd.f32 0.0, %v2088
      %v2090 = vpop.f32.mrb[0].mxu0
      %2091 = vmatprep.mubr.f32.mxu0 0.0
      %2092 = vmatmul.mubr.f32.gmra.mrb[0].mxu0 %v1874
      %v2093 = vpop.f32.mrb[0].mxu0
      %v2094 = vadd.f32 0.0, %v2093
      %v2095 = vpop.f32.mrb[0].mxu0
      %2096 = vmatprep.mubr.f32.mxu0 0.0
      %2097 = vmatmul.mubr.f32.gmra.mrb[0].mxu0 %v1877
      %v2098 = vpop.f32.mrb[0].mxu0
      %v2099 = vadd.f32 0.0, %v2098
      %v2100 = vpop.f32.mrb[0].mxu0
      %2101 = vmatprep.mubr.f32.mxu0 0.0
      %2102 = vmatmul.mubr.f32.gmra.mrb[0].mxu0 %v1880
      %v2103 = vpop.f32.mrb[0].mxu0
      %v2104 = vadd.f32 0.0, %v2103
      %v2105 = vpop.f32.mrb[0].mxu0
      %2106 = vmatprep.mubr.f32.mxu0 0.0
      %2107 = vmatmul.mubr.f32.gmra.mrb[0].mxu0 %v1883
      %v2108 = vpop.f32.mrb[0].mxu0
      %v2109 = vadd.f32 0.0, %v2108
      %v2110 = vpop.f32.mrb[0].mxu0
      %2111 = vmatprep.mubr.f32.mxu0 0.0
      %2112 = vmatmul.mubr.f32.gmra.mrb[0].mxu0 %v1886
      %v2113 = vpop.f32.mrb[0].mxu0
      %v2114 = vadd.f32 0.0, %v2113
      %v2115 = vpop.f32.mrb[0].mxu0
      %2116 = vdwg.mxu0
      %2117 = vst.msk [vmem:[%s199] sm:$0xff] %vm1555, %v1959
      %2118 = vst.msk [vmem:[%s199 + $0x8] sm:$0xff] %vm1555, %v1964
      %2119 = vst.msk [vmem:[%s199 + $0x10] sm:$0xff] %vm1555, %v1969
      %2120 = vst.msk [vmem:[%s199 + $0x18] sm:$0xff] %vm1555, %v1974
      %2121 = vst.msk [vmem:[%s199 + $0x20] sm:$0xff] %vm1555, %v1979
      %2122 = vst.msk [vmem:[%s199 + $0x28] sm:$0xff] %vm1555, %v1984
      %2123 = vst.msk [vmem:[%s199 + $0x30] sm:$0xff] %vm1555, %v1989
      %2124 = vst.msk [vmem:[%s199 + $0x38] sm:$0xff] %vm1555, %v1994
      %2125 = vst.msk [vmem:[%s199 + $0x40] sm:$0xff] %vm1555, %v1999
      %2126 = vst.msk [vmem:[%s199 + $0x48] sm:$0xff] %vm1555, %v2004
      %2127 = vst.msk [vmem:[%s199 + $0x50] sm:$0xff] %vm1555, %v2009
      %2128 = vst.msk [vmem:[%s199 + $0x58] sm:$0xff] %vm1555, %v2014
      %2129 = vst.msk [vmem:[%s199 + $0x60] sm:$0xff] %vm1555, %v2019
      %2130 = vst.msk [vmem:[%s199 + $0x68] sm:$0xff] %vm1555, %v2024
      %2131 = vst.msk [vmem:[%s199 + $0x70] sm:$0xff] %vm1555, %v2029
      %2132 = vst.msk [vmem:[%s199 + $0x78] sm:$0xff] %vm1555, %v2034
      %2133 = vst.msk [vmem:[%s199 + $0x80] sm:$0xff] %vm1555, %v2039
      %2134 = vst.msk [vmem:[%s199 + $0x88] sm:$0xff] %vm1555, %v2044
      %2135 = vst.msk [vmem:[%s199 + $0x90] sm:$0xff] %vm1555, %v2049
      %2136 = vst.msk [vmem:[%s199 + $0x98] sm:$0xff] %vm1555, %v2054
      %2137 = vst.msk [vmem:[%s199 + $0xa0] sm:$0xff] %vm1555, %v2059
      %2138 = vst.msk [vmem:[%s199 + $0xa8] sm:$0xff] %vm1555, %v2064
      %2139 = vst.msk [vmem:[%s199 + $0xb0] sm:$0xff] %vm1555, %v2069
      %2140 = vst.msk [vmem:[%s199 + $0xb8] sm:$0xff] %vm1555, %v2074
      %2141 = vst.msk [vmem:[%s199 + $0xc0] sm:$0xff] %vm1555, %v2079
      %2142 = vst.msk [vmem:[%s199 + $0xc8] sm:$0xff] %vm1555, %v2084
      %2143 = vst.msk [vmem:[%s199 + $0xd0] sm:$0xff] %vm1555, %v2089
      %2144 = vst.msk [vmem:[%s199 + $0xd8] sm:$0xff] %vm1555, %v2094
      %2145 = vst.msk [vmem:[%s199 + $0xe0] sm:$0xff] %vm1555, %v2099
      %2146 = vst.msk [vmem:[%s199 + $0xe8] sm:$0xff] %vm1555, %v2104
      %2147 = vst.msk [vmem:[%s199 + $0xf0] sm:$0xff] %vm1555, %v2109
      %2148 = vst.msk [vmem:[%s199 + $0xf8] sm:$0xff] %vm1555, %v2114
      %s2149 = smul.u32 16, %s20
      %p2150 = scmp.lt.s32.totalorder %s18, 1
      %s2151 = scalar_select %p2150, %s18, 1
      %p2152 = scmp.lt.s32.totalorder %s2149, 15
      %s2153 = scalar_select %p2152, %s2149, 15
      %p2154 = scmp.lt.s32.totalorder %s19, 0
      %s2155 = scalar_select %p2154, %s19, 0
      %s2156 = smul.addr %s2153, 2
      %s2157 = sadd.s32 %s2155, %s2156
      %s2158 = smul.addr %s2151, 32
      %s2159 = sadd.s32 %s2157, %s2158
      %s2160 = smul.addr %s2159, 8
      %s2161 = scalar_lea.vmem %s2, %s2160
      // Predicated region
      $region29: #{conv2d_pallas.1} parent=27 // pred_check
        %p2162 = pneg %p106
      $region30: #{conv2d_pallas.1} parent=27 // pred_check_branch
        %2164 = sbr.rel (%p2162) target = $region32
      $region31: #{conv2d_pallas.1} parent=27 // pred_region
        %s2165 = smul.u32 16, %s20
      $region32: #{conv2d_pallas.1} parent=27 // pred_fallthru
        _
    $region28: #{conv2d_pallas.1} parent=5 // pred_fallthru
      _
    %p2166 = scmp.le.s32.totalorder 2, %s8
    // Predicated region
    $region33: #{conv2d_pallas.1} parent=5 // pred_check
      %p2167 = pneg %p2166
    $region34: #{conv2d_pallas.1} parent=5 // pred_check_branch
      %2169 = sbr.rel (%p2167) target = $region36
    $region35: #{conv2d_pallas.1} parent=5 // pred_region
      %s2170 = ssub.s32 %s8, 2
      // Predicated region
      $region37: #{conv2d_pallas.1} parent=35 // pred_check
        %p2171 = pneg %p112
      $region38: #{conv2d_pallas.1} parent=35 // pred_check_branch
        %2173 = sbr.rel (%p2171) target = $region40
      $region39: #{conv2d_pallas.1} parent=35 // pred_region
        %s2174 = smul.u32 16, %s23
        %p2175 = scmp.lt.s32.totalorder %s21, 1
        %s2176 = scalar_select %p2175, %s21, 1
        %p2177 = scmp.lt.s32.totalorder %s2174, 15
        %s2178 = scalar_select %p2177, %s2174, 15
        %p2179 = scmp.lt.s32.totalorder %s22, 0
        %s2180 = scalar_select %p2179, %s22, 0
        %s2181 = smul.addr %s2178, 2
        %s2182 = sadd.s32 %s2180, %s2181
        %s2183 = smul.addr %s2176, 32
        %s2184 = sadd.s32 %s2182, %s2183
        %s2185 = smul.addr %s2184, 8
        %s2186 = scalar_lea.vmem %s2, %s2185
      $region40: #{conv2d_pallas.1} parent=35 // pred_fallthru
        _
    $region36: #{conv2d_pallas.1} parent=5 // pred_fallthru
      _
  $region6: #{conv2d_pallas.1} parent=0 // loop_footer
    %s12 = sadd.s32 1, %s8
  $region7: #{conv2d_pallas.1} parent=0 // loop_footer_branch
    %7 = sbr.rel target = $region3
  $region8: #{conv2d_pallas.1} parent=0 // loop_exit
    _

</llo_original>
